<compile_context>
chip_gen: v7x
topology: tpu7x:2x2x1
jax: 0.10.0
libtpu: 0.0.40
codegen_flags: <defaults>
</compile_context>

<pallas_src>
import math
import functools

import numpy as np
import jax
import jax.numpy as jnp
from jax import lax
from jax.experimental import pallas as pl
from jax.experimental.pallas import tpu as pltpu


# ----------------------------------------------------------------------------
# Positional encoding (host-side glue, matches the reference math)
# ----------------------------------------------------------------------------
def positional_encoding(position, model_dim):
    pos = np.arange(position)[:, np.newaxis].astype(np.float64)
    i = np.arange(model_dim)[np.newaxis, :].astype(np.float64)
    angle_rates = 1.0 / np.power(10000.0, (2.0 * (i // 2)) / np.float32(model_dim))
    angle_rads = pos * angle_rates
    angle_rads[:, 0::2] = np.sin(angle_rads[:, 0::2])
    angle_rads[:, 1::2] = np.cos(angle_rads[:, 1::2])
    return jnp.asarray(angle_rads[np.newaxis, ...], dtype=jnp.float32)  # (1, P, D)


# ----------------------------------------------------------------------------
# In-kernel helpers
# ----------------------------------------------------------------------------
def _layernorm(x, gamma, beta, eps=1e-6):
    mu = jnp.mean(x, axis=-1, keepdims=True)
    var = jnp.mean((x - mu) ** 2, axis=-1, keepdims=True)
    return (x - mu) * lax.rsqrt(var + eps) * gamma + beta


# ----------------------------------------------------------------------------
# Pallas kernel: one encoder layer for one (batch, query-tile) grid point
# ----------------------------------------------------------------------------
def encoder_layer_kernel(*refs, num_heads, q_block, add_pos):
    if add_pos:
        (x_ref, pos_ref,
         wq_ref, bq_ref, wk_ref, bk_ref, wv_ref, bv_ref, wo_ref, bo_ref,
         w1_ref, b1_ref, w2_ref, b2_ref,
         g1_ref, be1_ref, g2_ref, be2_ref, o_ref) = refs
    else:
        pos_ref = None
        (x_ref,
         wq_ref, bq_ref, wk_ref, bk_ref, wv_ref, bv_ref, wo_ref, bo_ref,
         w1_ref, b1_ref, w2_ref, b2_ref,
         g1_ref, be1_ref, g2_ref, be2_ref, o_ref) = refs

    S = x_ref.shape[1]
    D = x_ref.shape[2]
    H = num_heads
    depth = D // H
    scale = 1.0 / math.sqrt(depth)
    cdt = wq_ref.dtype  # matmul compute dtype (bf16); accumulation stays f32

    qi = pl.program_id(1)
    q_start = pl.multiple_of(qi * q_block, q_block)

    # Full sequence (for K/V) and this step's query block (for Q / residual).
    x_full = x_ref[0]                                   # (S, D) f32
    x_q = x_ref[0, pl.ds(q_start, q_block), :]          # (q_block, D) f32
    if add_pos:
        x_full = x_full + pos_ref[0]
        x_q = x_q + pos_ref[0, pl.ds(q_start, q_block), :]

    xf_c = x_full.astype(cdt)
    xq_c = x_q.astype(cdt)

    # --- multi-head attention: per-head weight tensors, no lane slicing/concat ---
    attn_out = jnp.zeros((q_block, D), jnp.float32)
    for h in range(H):                                  # static, unrolled
        qh = (jnp.dot(xq_c, wq_ref[h], preferred_element_type=jnp.float32)
              + bq_ref[h]) * scale                      # (q_block, depth)
        kh = jnp.dot(xf_c, wk_ref[h], preferred_element_type=jnp.float32) + bk_ref[h]
        vh = jnp.dot(xf_c, wv_ref[h], preferred_element_type=jnp.float32) + bv_ref[h]

        logits = jnp.einsum("qd,kd->qk", qh.astype(cdt), kh.astype(cdt),
                            preferred_element_type=jnp.float32)      # (q_block, S)
        logits = logits - jnp.max(logits, axis=-1, keepdims=True)
        p = jnp.exp(logits)
        attn = p * pl.reciprocal(jnp.sum(p, axis=-1, keepdims=True), approx=True)

        ctx = jnp.dot(attn.astype(cdt), vh.astype(cdt),
                      preferred_element_type=jnp.float32)            # (q_block, depth)
        # fused output projection: sum_h ctx_h @ Wo[h]  (== concat @ Wo)
        attn_out = attn_out + jnp.dot(ctx.astype(cdt), wo_ref[h],
                                      preferred_element_type=jnp.float32)
    attn_out = attn_out + bo_ref[0]

    # dropout1: identity (inference)
    out1 = _layernorm(x_q + attn_out, g1_ref[0], be1_ref[0])

    # --- feed-forward network ---
    hdn = jnp.dot(out1.astype(cdt), w1_ref[...],
                  preferred_element_type=jnp.float32) + b1_ref[0]
    hdn = jnp.maximum(hdn, 0.0)
    ffn = jnp.dot(hdn.astype(cdt), w2_ref[...],
                  preferred_element_type=jnp.float32) + b2_ref[0]

    # dropout2: identity (inference)
    out2 = _layernorm(out1 + ffn, g2_ref[0], be2_ref[0])

    o_ref[0] = out2.astype(o_ref.dtype)


# ----------------------------------------------------------------------------
# Wrapper: one encoder layer
# ----------------------------------------------------------------------------
def encoder_layer(x, p, num_heads, pos=None, matmul_dtype=jnp.bfloat16):
    """One EncoderNN layer. x: (B, S, D) float32; pos: optional (1, S, D)."""
    B, S, D = x.shape
    H = num_heads
    assert D % H == 0
    dp = D // H
    F = p["w1"].shape[1]

    # query-tile size: full S for short sequences, 128/256-aligned tiles otherwise
    if S <= 256:
        q_block = S
    elif S % 256 == 0:
        q_block = 256
    elif S % 128 == 0:
        q_block = 128
    else:
        q_block = S
    n_q = S // q_block

    cd = matmul_dtype
    # Per-head weight layouts (cheap one-time parameter reshapes outside kernel).
    wq_h = p["wq"].reshape(D, H, dp).transpose(1, 0, 2).astype(cd)   # (H, D, dp)
    wk_h = p["wk"].reshape(D, H, dp).transpose(1, 0, 2).astype(cd)
    wv_h = p["wv"].reshape(D, H, dp).transpose(1, 0, 2).astype(cd)
    wo_h = p["wo"].reshape(H, dp, D).astype(cd)                      # (H, dp, D)
    bq_h = p["bq"].reshape(H, 1, dp)
    bk_h = p["bk"].reshape(H, 1, dp)
    bv_h = p["bv"].reshape(H, 1, dp)
    w1 = p["w1"].astype(cd)
    w2 = p["w2"].astype(cd)

    weights = [wq_h, bq_h, wk_h, bk_h, wv_h, bv_h, wo_h, p["bo"],
               w1, p["b1"], w2, p["b2"],
               p["ln1_g"], p["ln1_b"], p["ln2_g"], p["ln2_b"]]

    def full_spec(arr):
        nd = arr.ndim
        return pl.BlockSpec(arr.shape, lambda b, qi, _nd=nd: (0,) * _nd)

    in_specs = [pl.BlockSpec((1, S, D), lambda b, qi: (b, 0, 0))]
    inputs = [x]
    add_pos = pos is not None
    if add_pos:
        in_specs.append(pl.BlockSpec((1, S, D), lambda b, qi: (0, 0, 0)))
        inputs.append(pos.astype(jnp.float32))
    in_specs += [full_spec(w) for w in weights]
    inputs += weights

    out_specs = pl.BlockSpec((1, q_block, D), lambda b, qi: (b, qi, 0))

    # cost estimate (per forward of this layer)
    flops = 2 * B * S * (4 * D * D + 2 * S * D + 2 * D * F)
    transcendentals = B * H * S * S + 2 * B * S
    wbytes = sum(int(np.prod(w.shape)) * int(jnp.dtype(w.dtype).itemsize)
                 for w in weights)
    bytes_accessed = 2 * B * S * D * 4 + wbytes + (S * D * 4 if add_pos else 0)
    cost = pl.CostEstimate(flops=int(flops),
                           transcendentals=int(transcendentals),
                           bytes_accessed=int(bytes_accessed))

    # explicit VMEM budget: (double-buffered) inputs/outputs + rough live activations
    xblock = S * D * 4
    oblock = q_block * D * 4
    live = 6 * q_block * max(D, F) * 4 + 4 * S * D * 4
    vmem_limit_bytes = int(min(48 * 2**20,
                               max(16 * 2**20,
                                   2 * (wbytes + 2 * xblock + 2 * oblock)
                                   + live + (2 << 20))))

    kernel = functools.partial(encoder_layer_kernel,
                               num_heads=H, q_block=q_block, add_pos=add_pos)

    return pl.pallas_call(
        kernel,
        out_shape=jax.ShapeDtypeStruct((B, S, D), jnp.float32),
        grid=(B, n_q),
        in_specs=in_specs,
        out_specs=out_specs,
        compiler_params=pltpu.CompilerParams(
            dimension_semantics=("parallel", "parallel"),
            vmem_limit_bytes=vmem_limit_bytes,
        ),
        cost_estimate=cost,
    )(*inputs)


# ----------------------------------------------------------------------------
# Full Encoder forward
# ----------------------------------------------------------------------------
def encoder_forward(x, layer_params, pos_encoding, num_heads):
    B, S, D = x.shape
    pos = pos_encoding[:, :S, :]          # (1, S, D)
    if not layer_params:
        return x + pos                     # degenerate: no layers
    out = x
    for li, p in enumerate(layer_params):
        # positional-encoding add is fused into the first layer's kernel
        out = encoder_layer(out, p, num_heads, pos=pos if li == 0 else None)
    return out


# ----------------------------------------------------------------------------
# Deterministic parameter init
# ----------------------------------------------------------------------------
def init_layer_params(key, model_dim, ff_dim):
    keys = jax.random.split(key, 6)
    D, F = model_dim, ff_dim

    def w(k, shape):
        return (jax.random.normal(k, shape, jnp.float32) * 0.02).astype(jnp.float32)

    return {
        "wq": w(keys[0], (D, D)), "bq": jnp.zeros((1, D), jnp.float32),
        "wk": w(keys[1], (D, D)), "bk": jnp.zeros((1, D), jnp.float32),
        "wv": w(keys[2], (D, D)), "bv": jnp.zeros((1, D), jnp.float32),
        "wo": w(keys[3], (D, D)), "bo": jnp.zeros((1, D), jnp.float32),
        "w1": w(keys[4], (D, F)), "b1": jnp.zeros((1, F), jnp.float32),
        "w2": w(keys[5], (F, D)), "b2": jnp.zeros((1, D), jnp.float32),
        "ln1_g": jnp.ones((1, D), jnp.float32), "ln1_b": jnp.zeros((1, D), jnp.float32),
        "ln2_g": jnp.ones((1, D), jnp.float32), "ln2_b": jnp.zeros((1, D), jnp.float32),
    }


if __name__ == "__main__":
    # small shapes consistent with the module
    B, S, D, H, F, L = 2, 8, 32, 4, 64, 2

    root = jax.random.PRNGKey(0)
    k_x, k_p = jax.random.split(root)
    x = jax.random.normal(k_x, (B, S, D), jnp.float32)

    layer_keys = jax.random.split(k_p, L)
    layer_params = [init_layer_params(layer_keys[i], D, F) for i in range(L)]

    pos_enc = positional_encoding(1000, D)   # (1, 1000, D)

    out = encoder_forward(x, layer_params, pos_enc, num_heads=H)
    jax.block_until_ready(out)
    assert out.shape == (B, S, D)
    assert bool(jnp.all(jnp.isfinite(out)))
    print("KERNEL_OK")
</pallas_src>

<mosaic_0001>
module attributes {stable_mosaic.version = 11 : i64} {
  func.func @encoder_layer_kernel(%arg0: i32, %arg1: i32, %arg2: memref<1x8x32xf32, #tpu.memory_space<vmem>>, %arg3: memref<1x8x32xf32, #tpu.memory_space<vmem>>, %arg4: memref<4x32x8xbf16, #tpu.memory_space<vmem>>, %arg5: memref<4x1x8xf32, #tpu.memory_space<vmem>>, %arg6: memref<4x32x8xbf16, #tpu.memory_space<vmem>>, %arg7: memref<4x1x8xf32, #tpu.memory_space<vmem>>, %arg8: memref<4x32x8xbf16, #tpu.memory_space<vmem>>, %arg9: memref<4x1x8xf32, #tpu.memory_space<vmem>>, %arg10: memref<4x8x32xbf16, #tpu.memory_space<vmem>>, %arg11: memref<1x32xf32, #tpu.memory_space<vmem>>, %arg12: memref<32x64xbf16, #tpu.memory_space<vmem>>, %arg13: memref<1x64xf32, #tpu.memory_space<vmem>>, %arg14: memref<64x32xbf16, #tpu.memory_space<vmem>>, %arg15: memref<1x32xf32, #tpu.memory_space<vmem>>, %arg16: memref<1x32xf32, #tpu.memory_space<vmem>>, %arg17: memref<1x32xf32, #tpu.memory_space<vmem>>, %arg18: memref<1x32xf32, #tpu.memory_space<vmem>>, %arg19: memref<1x32xf32, #tpu.memory_space<vmem>>, %arg20: memref<1x8x32xf32, #tpu.memory_space<vmem>>) attributes {dimension_semantics = [#tpu.dimension_semantics<parallel>, #tpu.dimension_semantics<parallel>], iteration_bounds = array<i64: 2, 1>, scalar_prefetch = 0 : i64, scratch_operands = 0 : i64, tpu.core_type = #tpu.core_type<tc>, window_params = [{transform_indices = @transform_0, window_bounds = array<i64: 1, 8, 32>}, {pipeline_mode = #tpu.pipeline_mode<synchronous>, transform_indices = @transform_1, window_bounds = array<i64: 1, 8, 32>}, {pipeline_mode = #tpu.pipeline_mode<synchronous>, transform_indices = @transform_2, window_bounds = array<i64: 4, 32, 8>}, {pipeline_mode = #tpu.pipeline_mode<synchronous>, transform_indices = @transform_3, window_bounds = array<i64: 4, 1, 8>}, {pipeline_mode = #tpu.pipeline_mode<synchronous>, transform_indices = @transform_4, window_bounds = array<i64: 4, 32, 8>}, {pipeline_mode = #tpu.pipeline_mode<synchronous>, transform_indices = @transform_5, window_bounds = array<i64: 4, 1, 8>}, {pipeline_mode = #tpu.pipeline_mode<synchronous>, transform_indices = @transform_6, window_bounds = array<i64: 4, 32, 8>}, {pipeline_mode = #tpu.pipeline_mode<synchronous>, transform_indices = @transform_7, window_bounds = array<i64: 4, 1, 8>}, {pipeline_mode = #tpu.pipeline_mode<synchronous>, transform_indices = @transform_8, window_bounds = array<i64: 4, 8, 32>}, {pipeline_mode = #tpu.pipeline_mode<synchronous>, transform_indices = @transform_9, window_bounds = array<i64: 1, 32>}, {pipeline_mode = #tpu.pipeline_mode<synchronous>, transform_indices = @transform_10, window_bounds = array<i64: 32, 64>}, {pipeline_mode = #tpu.pipeline_mode<synchronous>, transform_indices = @transform_11, window_bounds = array<i64: 1, 64>}, {pipeline_mode = #tpu.pipeline_mode<synchronous>, transform_indices = @transform_12, window_bounds = array<i64: 64, 32>}, {pipeline_mode = #tpu.pipeline_mode<synchronous>, transform_indices = @transform_13, window_bounds = array<i64: 1, 32>}, {pipeline_mode = #tpu.pipeline_mode<synchronous>, transform_indices = @transform_14, window_bounds = array<i64: 1, 32>}, {pipeline_mode = #tpu.pipeline_mode<synchronous>, transform_indices = @transform_15, window_bounds = array<i64: 1, 32>}, {pipeline_mode = #tpu.pipeline_mode<synchronous>, transform_indices = @transform_16, window_bounds = array<i64: 1, 32>}, {pipeline_mode = #tpu.pipeline_mode<synchronous>, transform_indices = @transform_17, window_bounds = array<i64: 1, 32>}, {transform_indices = @transform_18, window_bounds = array<i64: 1, 8, 32>}]} {
    %c8_i32 = arith.constant 8 : i32
    %0 = arith.muli %arg1, %c8_i32 : i32
    %1 = tpu.assume_multiple %0, 8 : i32
    %c0 = arith.constant 0 : index
    %c0_0 = arith.constant 0 : index
    %c0_1 = arith.constant 0 : index
    %2 = vector.load %arg2[%c0, %c0_0, %c0_1] : memref<1x8x32xf32, #tpu.memory_space<vmem>>, vector<1x8x32xf32>
    %3 = vector.shape_cast %2 : vector<1x8x32xf32> to vector<8x32xf32>
    %c0_2 = arith.constant 0 : index
    %4 = arith.index_cast %1 : i32 to index
    %c0_3 = arith.constant 0 : index
    %5 = vector.load %arg2[%c0_2, %4, %c0_3] : memref<1x8x32xf32, #tpu.memory_space<vmem>>, vector<1x8x32xf32>
    %6 = vector.shape_cast %5 : vector<1x8x32xf32> to vector<8x32xf32>
    %c0_4 = arith.constant 0 : index
    %c0_5 = arith.constant 0 : index
    %c0_6 = arith.constant 0 : index
    %7 = vector.load %arg3[%c0_4, %c0_5, %c0_6] : memref<1x8x32xf32, #tpu.memory_space<vmem>>, vector<1x8x32xf32>
    %8 = vector.shape_cast %7 : vector<1x8x32xf32> to vector<8x32xf32>
    %9 = arith.addf %3, %8 : vector<8x32xf32>
    %c0_7 = arith.constant 0 : index
    %10 = arith.index_cast %1 : i32 to index
    %c0_8 = arith.constant 0 : index
    %11 = vector.load %arg3[%c0_7, %10, %c0_8] : memref<1x8x32xf32, #tpu.memory_space<vmem>>, vector<1x8x32xf32>
    %12 = vector.shape_cast %11 : vector<1x8x32xf32> to vector<8x32xf32>
    %13 = arith.addf %6, %12 : vector<8x32xf32>
    %14 = arith.truncf %9 : vector<8x32xf32> to vector<8x32xbf16>
    %15 = arith.truncf %13 : vector<8x32xf32> to vector<8x32xbf16>
    %cst = arith.constant 0.000000e+00 : f32
    %16 = vector.broadcast %cst : f32 to vector<8x32xf32>
    %c0_9 = arith.constant 0 : index
    %c0_10 = arith.constant 0 : index
    %c0_11 = arith.constant 0 : index
    %17 = vector.load %arg4[%c0_9, %c0_10, %c0_11] : memref<4x32x8xbf16, #tpu.memory_space<vmem>>, vector<1x32x8xbf16>
    %18 = vector.shape_cast %17 : vector<1x32x8xbf16> to vector<32x8xbf16>
    %cst_12 = arith.constant dense<0.000000e+00> : vector<8x8xf32>
    %19 = tpu.matmul %15, %18, %cst_12 {dimension_numbers = #tpu.dot_dimension_numbers<[1], [0], [0], [1], [0, 0, 1, 1], [], []>} : vector<8x32xbf16>, vector<32x8xbf16>, vector<8x8xf32> -> vector<8x8xf32>
    %c0_13 = arith.constant 0 : index
    %c0_14 = arith.constant 0 : index
    %c0_15 = arith.constant 0 : index
    %20 = vector.load %arg5[%c0_13, %c0_14, %c0_15] : memref<4x1x8xf32, #tpu.memory_space<vmem>>, vector<1x1x8xf32>
    %21 = vector.shape_cast %20 : vector<1x1x8xf32> to vector<1x8xf32>
    %22 = vector.broadcast %21 : vector<1x8xf32> to vector<8x8xf32>
    %23 = arith.addf %19, %22 : vector<8x8xf32>
    %cst_16 = arith.constant 0.353553385 : f32
    %24 = vector.broadcast %cst_16 : f32 to vector<8x8xf32>
    %25 = arith.mulf %23, %24 : vector<8x8xf32>
    %c0_17 = arith.constant 0 : index
    %c0_18 = arith.constant 0 : index
    %c0_19 = arith.constant 0 : index
    %26 = vector.load %arg6[%c0_17, %c0_18, %c0_19] : memref<4x32x8xbf16, #tpu.memory_space<vmem>>, vector<1x32x8xbf16>
    %27 = vector.shape_cast %26 : vector<1x32x8xbf16> to vector<32x8xbf16>
    %cst_20 = arith.constant dense<0.000000e+00> : vector<8x8xf32>
    %28 = tpu.matmul %14, %27, %cst_20 {dimension_numbers = #tpu.dot_dimension_numbers<[1], [0], [0], [1], [0, 0, 1, 1], [], []>} : vector<8x32xbf16>, vector<32x8xbf16>, vector<8x8xf32> -> vector<8x8xf32>
    %c0_21 = arith.constant 0 : index
    %c0_22 = arith.constant 0 : index
    %c0_23 = arith.constant 0 : index
    %29 = vector.load %arg7[%c0_21, %c0_22, %c0_23] : memref<4x1x8xf32, #tpu.memory_space<vmem>>, vector<1x1x8xf32>
    %30 = vector.shape_cast %29 : vector<1x1x8xf32> to vector<1x8xf32>
    %31 = vector.broadcast %30 : vector<1x8xf32> to vector<8x8xf32>
    %32 = arith.addf %28, %31 : vector<8x8xf32>
    %c0_24 = arith.constant 0 : index
    %c0_25 = arith.constant 0 : index
    %c0_26 = arith.constant 0 : index
    %33 = vector.load %arg8[%c0_24, %c0_25, %c0_26] : memref<4x32x8xbf16, #tpu.memory_space<vmem>>, vector<1x32x8xbf16>
    %34 = vector.shape_cast %33 : vector<1x32x8xbf16> to vector<32x8xbf16>
    %cst_27 = arith.constant dense<0.000000e+00> : vector<8x8xf32>
    %35 = tpu.matmul %14, %34, %cst_27 {dimension_numbers = #tpu.dot_dimension_numbers<[1], [0], [0], [1], [0, 0, 1, 1], [], []>} : vector<8x32xbf16>, vector<32x8xbf16>, vector<8x8xf32> -> vector<8x8xf32>
    %c0_28 = arith.constant 0 : index
    %c0_29 = arith.constant 0 : index
    %c0_30 = arith.constant 0 : index
    %36 = vector.load %arg9[%c0_28, %c0_29, %c0_30] : memref<4x1x8xf32, #tpu.memory_space<vmem>>, vector<1x1x8xf32>
    %37 = vector.shape_cast %36 : vector<1x1x8xf32> to vector<1x8xf32>
    %38 = vector.broadcast %37 : vector<1x8xf32> to vector<8x8xf32>
    %39 = arith.addf %35, %38 : vector<8x8xf32>
    %40 = arith.truncf %25 : vector<8x8xf32> to vector<8x8xbf16>
    %41 = arith.truncf %32 : vector<8x8xf32> to vector<8x8xbf16>
    "tpu.trace_start"() <{level = 10 : i32, message = "qd,kd->qk"}> : () -> ()
    %cst_31 = arith.constant dense<0.000000e+00> : vector<8x8xf32>
    %42 = tpu.matmul %40, %41, %cst_31 {dimension_numbers = #tpu.dot_dimension_numbers<[1], [1], [0], [0], [0, 0, 1, 0], [], []>} : vector<8x8xbf16>, vector<8x8xbf16>, vector<8x8xf32> -> vector<8x8xf32>
    "tpu.trace_stop"() : () -> ()
    %cst_32 = arith.constant dense<0xFF800000> : vector<8xf32>
    %43 = vector.multi_reduction <maximumf>, %42, %cst_32 [1] : vector<8x8xf32> to vector<8xf32>
    %44 = vector.shape_cast %43 : vector<8xf32> to vector<8x1xf32>
    %45 = vector.broadcast %44 : vector<8x1xf32> to vector<8x8xf32>
    %46 = arith.subf %42, %45 : vector<8x8xf32>
    %47 = math.exp %46 : vector<8x8xf32>
    %cst_33 = arith.constant dense<0.000000e+00> : vector<8xf32>
    %48 = vector.multi_reduction <add>, %47, %cst_33 [1] : vector<8x8xf32> to vector<8xf32>
    %49 = vector.shape_cast %48 : vector<8xf32> to vector<8x1xf32>
    %50 = tpu.reciprocal %49 {approx = true} : vector<8x1xf32> -> vector<8x1xf32>
    %51 = vector.broadcast %50 : vector<8x1xf32> to vector<8x8xf32>
    %52 = arith.mulf %47, %51 : vector<8x8xf32>
    %53 = arith.truncf %52 : vector<8x8xf32> to vector<8x8xbf16>
    %54 = arith.truncf %39 : vector<8x8xf32> to vector<8x8xbf16>
    %cst_34 = arith.constant dense<0.000000e+00> : vector<8x8xf32>
    %55 = tpu.matmul %53, %54, %cst_34 {dimension_numbers = #tpu.dot_dimension_numbers<[1], [0], [0], [1], [0, 0, 1, 1], [], []>} : vector<8x8xbf16>, vector<8x8xbf16>, vector<8x8xf32> -> vector<8x8xf32>
    %56 = arith.truncf %55 : vector<8x8xf32> to vector<8x8xbf16>
    %c0_35 = arith.constant 0 : index
    %c0_36 = arith.constant 0 : index
    %c0_37 = arith.constant 0 : index
    %57 = vector.load %arg10[%c0_35, %c0_36, %c0_37] : memref<4x8x32xbf16, #tpu.memory_space<vmem>>, vector<1x8x32xbf16>
    %58 = vector.shape_cast %57 : vector<1x8x32xbf16> to vector<8x32xbf16>
    %cst_38 = arith.constant dense<0.000000e+00> : vector<8x32xf32>
    %59 = tpu.matmul %56, %58, %cst_38 {dimension_numbers = #tpu.dot_dimension_numbers<[1], [0], [0], [1], [0, 0, 1, 1], [], []>} : vector<8x8xbf16>, vector<8x32xbf16>, vector<8x32xf32> -> vector<8x32xf32>
    %60 = arith.addf %16, %59 : vector<8x32xf32>
    %c1 = arith.constant 1 : index
    %c0_39 = arith.constant 0 : index
    %c0_40 = arith.constant 0 : index
    %61 = vector.load %arg4[%c1, %c0_39, %c0_40] : memref<4x32x8xbf16, #tpu.memory_space<vmem>>, vector<1x32x8xbf16>
    %62 = vector.shape_cast %61 : vector<1x32x8xbf16> to vector<32x8xbf16>
    %cst_41 = arith.constant dense<0.000000e+00> : vector<8x8xf32>
    %63 = tpu.matmul %15, %62, %cst_41 {dimension_numbers = #tpu.dot_dimension_numbers<[1], [0], [0], [1], [0, 0, 1, 1], [], []>} : vector<8x32xbf16>, vector<32x8xbf16>, vector<8x8xf32> -> vector<8x8xf32>
    %c1_42 = arith.constant 1 : index
    %c0_43 = arith.constant 0 : index
    %c0_44 = arith.constant 0 : index
    %64 = vector.load %arg5[%c1_42, %c0_43, %c0_44] : memref<4x1x8xf32, #tpu.memory_space<vmem>>, vector<1x1x8xf32>
    %65 = vector.shape_cast %64 : vector<1x1x8xf32> to vector<1x8xf32>
    %66 = vector.broadcast %65 : vector<1x8xf32> to vector<8x8xf32>
    %67 = arith.addf %63, %66 : vector<8x8xf32>
    %cst_45 = arith.constant 0.353553385 : f32
    %68 = vector.broadcast %cst_45 : f32 to vector<8x8xf32>
    %69 = arith.mulf %67, %68 : vector<8x8xf32>
    %c1_46 = arith.constant 1 : index
    %c0_47 = arith.constant 0 : index
    %c0_48 = arith.constant 0 : index
    %70 = vector.load %arg6[%c1_46, %c0_47, %c0_48] : memref<4x32x8xbf16, #tpu.memory_space<vmem>>, vector<1x32x8xbf16>
    %71 = vector.shape_cast %70 : vector<1x32x8xbf16> to vector<32x8xbf16>
    %cst_49 = arith.constant dense<0.000000e+00> : vector<8x8xf32>
    %72 = tpu.matmul %14, %71, %cst_49 {dimension_numbers = #tpu.dot_dimension_numbers<[1], [0], [0], [1], [0, 0, 1, 1], [], []>} : vector<8x32xbf16>, vector<32x8xbf16>, vector<8x8xf32> -> vector<8x8xf32>
    %c1_50 = arith.constant 1 : index
    %c0_51 = arith.constant 0 : index
    %c0_52 = arith.constant 0 : index
    %73 = vector.load %arg7[%c1_50, %c0_51, %c0_52] : memref<4x1x8xf32, #tpu.memory_space<vmem>>, vector<1x1x8xf32>
    %74 = vector.shape_cast %73 : vector<1x1x8xf32> to vector<1x8xf32>
    %75 = vector.broadcast %74 : vector<1x8xf32> to vector<8x8xf32>
    %76 = arith.addf %72, %75 : vector<8x8xf32>
    %c1_53 = arith.constant 1 : index
    %c0_54 = arith.constant 0 : index
    %c0_55 = arith.constant 0 : index
    %77 = vector.load %arg8[%c1_53, %c0_54, %c0_55] : memref<4x32x8xbf16, #tpu.memory_space<vmem>>, vector<1x32x8xbf16>
    %78 = vector.shape_cast %77 : vector<1x32x8xbf16> to vector<32x8xbf16>
    %cst_56 = arith.constant dense<0.000000e+00> : vector<8x8xf32>
    %79 = tpu.matmul %14, %78, %cst_56 {dimension_numbers = #tpu.dot_dimension_numbers<[1], [0], [0], [1], [0, 0, 1, 1], [], []>} : vector<8x32xbf16>, vector<32x8xbf16>, vector<8x8xf32> -> vector<8x8xf32>
    %c1_57 = arith.constant 1 : index
    %c0_58 = arith.constant 0 : index
    %c0_59 = arith.constant 0 : index
    %80 = vector.load %arg9[%c1_57, %c0_58, %c0_59] : memref<4x1x8xf32, #tpu.memory_space<vmem>>, vector<1x1x8xf32>
    %81 = vector.shape_cast %80 : vector<1x1x8xf32> to vector<1x8xf32>
    %82 = vector.broadcast %81 : vector<1x8xf32> to vector<8x8xf32>
    %83 = arith.addf %79, %82 : vector<8x8xf32>
    %84 = arith.truncf %69 : vector<8x8xf32> to vector<8x8xbf16>
    %85 = arith.truncf %76 : vector<8x8xf32> to vector<8x8xbf16>
    "tpu.trace_start"() <{level = 10 : i32, message = "qd,kd->qk"}> : () -> ()
    %cst_60 = arith.constant dense<0.000000e+00> : vector<8x8xf32>
    %86 = tpu.matmul %84, %85, %cst_60 {dimension_numbers = #tpu.dot_dimension_numbers<[1], [1], [0], [0], [0, 0, 1, 0], [], []>} : vector<8x8xbf16>, vector<8x8xbf16>, vector<8x8xf32> -> vector<8x8xf32>
    "tpu.trace_stop"() : () -> ()
    %cst_61 = arith.constant dense<0xFF800000> : vector<8xf32>
    %87 = vector.multi_reduction <maximumf>, %86, %cst_61 [1] : vector<8x8xf32> to vector<8xf32>
    %88 = vector.shape_cast %87 : vector<8xf32> to vector<8x1xf32>
    %89 = vector.broadcast %88 : vector<8x1xf32> to vector<8x8xf32>
    %90 = arith.subf %86, %89 : vector<8x8xf32>
    %91 = math.exp %90 : vector<8x8xf32>
    %cst_62 = arith.constant dense<0.000000e+00> : vector<8xf32>
    %92 = vector.multi_reduction <add>, %91, %cst_62 [1] : vector<8x8xf32> to vector<8xf32>
    %93 = vector.shape_cast %92 : vector<8xf32> to vector<8x1xf32>
    %94 = tpu.reciprocal %93 {approx = true} : vector<8x1xf32> -> vector<8x1xf32>
    %95 = vector.broadcast %94 : vector<8x1xf32> to vector<8x8xf32>
    %96 = arith.mulf %91, %95 : vector<8x8xf32>
    %97 = arith.truncf %96 : vector<8x8xf32> to vector<8x8xbf16>
    %98 = arith.truncf %83 : vector<8x8xf32> to vector<8x8xbf16>
    %cst_63 = arith.constant dense<0.000000e+00> : vector<8x8xf32>
    %99 = tpu.matmul %97, %98, %cst_63 {dimension_numbers = #tpu.dot_dimension_numbers<[1], [0], [0], [1], [0, 0, 1, 1], [], []>} : vector<8x8xbf16>, vector<8x8xbf16>, vector<8x8xf32> -> vector<8x8xf32>
    %100 = arith.truncf %99 : vector<8x8xf32> to vector<8x8xbf16>
    %c1_64 = arith.constant 1 : index
    %c0_65 = arith.constant 0 : index
    %c0_66 = arith.constant 0 : index
    %101 = vector.load %arg10[%c1_64, %c0_65, %c0_66] : memref<4x8x32xbf16, #tpu.memory_space<vmem>>, vector<1x8x32xbf16>
    %102 = vector.shape_cast %101 : vector<1x8x32xbf16> to vector<8x32xbf16>
    %cst_67 = arith.constant dense<0.000000e+00> : vector<8x32xf32>
    %103 = tpu.matmul %100, %102, %cst_67 {dimension_numbers = #tpu.dot_dimension_numbers<[1], [0], [0], [1], [0, 0, 1, 1], [], []>} : vector<8x8xbf16>, vector<8x32xbf16>, vector<8x32xf32> -> vector<8x32xf32>
    %104 = arith.addf %60, %103 : vector<8x32xf32>
    %c2 = arith.constant 2 : index
    %c0_68 = arith.constant 0 : index
    %c0_69 = arith.constant 0 : index
    %105 = vector.load %arg4[%c2, %c0_68, %c0_69] : memref<4x32x8xbf16, #tpu.memory_space<vmem>>, vector<1x32x8xbf16>
    %106 = vector.shape_cast %105 : vector<1x32x8xbf16> to vector<32x8xbf16>
    %cst_70 = arith.constant dense<0.000000e+00> : vector<8x8xf32>
    %107 = tpu.matmul %15, %106, %cst_70 {dimension_numbers = #tpu.dot_dimension_numbers<[1], [0], [0], [1], [0, 0, 1, 1], [], []>} : vector<8x32xbf16>, vector<32x8xbf16>, vector<8x8xf32> -> vector<8x8xf32>
    %c2_71 = arith.constant 2 : index
    %c0_72 = arith.constant 0 : index
    %c0_73 = arith.constant 0 : index
    %108 = vector.load %arg5[%c2_71, %c0_72, %c0_73] : memref<4x1x8xf32, #tpu.memory_space<vmem>>, vector<1x1x8xf32>
    %109 = vector.shape_cast %108 : vector<1x1x8xf32> to vector<1x8xf32>
    %110 = vector.broadcast %109 : vector<1x8xf32> to vector<8x8xf32>
    %111 = arith.addf %107, %110 : vector<8x8xf32>
    %cst_74 = arith.constant 0.353553385 : f32
    %112 = vector.broadcast %cst_74 : f32 to vector<8x8xf32>
    %113 = arith.mulf %111, %112 : vector<8x8xf32>
    %c2_75 = arith.constant 2 : index
    %c0_76 = arith.constant 0 : index
    %c0_77 = arith.constant 0 : index
    %114 = vector.load %arg6[%c2_75, %c0_76, %c0_77] : memref<4x32x8xbf16, #tpu.memory_space<vmem>>, vector<1x32x8xbf16>
    %115 = vector.shape_cast %114 : vector<1x32x8xbf16> to vector<32x8xbf16>
    %cst_78 = arith.constant dense<0.000000e+00> : vector<8x8xf32>
    %116 = tpu.matmul %14, %115, %cst_78 {dimension_numbers = #tpu.dot_dimension_numbers<[1], [0], [0], [1], [0, 0, 1, 1], [], []>} : vector<8x32xbf16>, vector<32x8xbf16>, vector<8x8xf32> -> vector<8x8xf32>
    %c2_79 = arith.constant 2 : index
    %c0_80 = arith.constant 0 : index
    %c0_81 = arith.constant 0 : index
    %117 = vector.load %arg7[%c2_79, %c0_80, %c0_81] : memref<4x1x8xf32, #tpu.memory_space<vmem>>, vector<1x1x8xf32>
    %118 = vector.shape_cast %117 : vector<1x1x8xf32> to vector<1x8xf32>
    %119 = vector.broadcast %118 : vector<1x8xf32> to vector<8x8xf32>
    %120 = arith.addf %116, %119 : vector<8x8xf32>
    %c2_82 = arith.constant 2 : index
    %c0_83 = arith.constant 0 : index
    %c0_84 = arith.constant 0 : index
    %121 = vector.load %arg8[%c2_82, %c0_83, %c0_84] : memref<4x32x8xbf16, #tpu.memory_space<vmem>>, vector<1x32x8xbf16>
    %122 = vector.shape_cast %121 : vector<1x32x8xbf16> to vector<32x8xbf16>
    %cst_85 = arith.constant dense<0.000000e+00> : vector<8x8xf32>
    %123 = tpu.matmul %14, %122, %cst_85 {dimension_numbers = #tpu.dot_dimension_numbers<[1], [0], [0], [1], [0, 0, 1, 1], [], []>} : vector<8x32xbf16>, vector<32x8xbf16>, vector<8x8xf32> -> vector<8x8xf32>
    %c2_86 = arith.constant 2 : index
    %c0_87 = arith.constant 0 : index
    %c0_88 = arith.constant 0 : index
    %124 = vector.load %arg9[%c2_86, %c0_87, %c0_88] : memref<4x1x8xf32, #tpu.memory_space<vmem>>, vector<1x1x8xf32>
    %125 = vector.shape_cast %124 : vector<1x1x8xf32> to vector<1x8xf32>
    %126 = vector.broadcast %125 : vector<1x8xf32> to vector<8x8xf32>
    %127 = arith.addf %123, %126 : vector<8x8xf32>
    %128 = arith.truncf %113 : vector<8x8xf32> to vector<8x8xbf16>
    %129 = arith.truncf %120 : vector<8x8xf32> to vector<8x8xbf16>
    "tpu.trace_start"() <{level = 10 : i32, message = "qd,kd->qk"}> : () -> ()
    %cst_89 = arith.constant dense<0.000000e+00> : vector<8x8xf32>
    %130 = tpu.matmul %128, %129, %cst_89 {dimension_numbers = #tpu.dot_dimension_numbers<[1], [1], [0], [0], [0, 0, 1, 0], [], []>} : vector<8x8xbf16>, vector<8x8xbf16>, vector<8x8xf32> -> vector<8x8xf32>
    "tpu.trace_stop"() : () -> ()
    %cst_90 = arith.constant dense<0xFF800000> : vector<8xf32>
    %131 = vector.multi_reduction <maximumf>, %130, %cst_90 [1] : vector<8x8xf32> to vector<8xf32>
    %132 = vector.shape_cast %131 : vector<8xf32> to vector<8x1xf32>
    %133 = vector.broadcast %132 : vector<8x1xf32> to vector<8x8xf32>
    %134 = arith.subf %130, %133 : vector<8x8xf32>
    %135 = math.exp %134 : vector<8x8xf32>
    %cst_91 = arith.constant dense<0.000000e+00> : vector<8xf32>
    %136 = vector.multi_reduction <add>, %135, %cst_91 [1] : vector<8x8xf32> to vector<8xf32>
    %137 = vector.shape_cast %136 : vector<8xf32> to vector<8x1xf32>
    %138 = tpu.reciprocal %137 {approx = true} : vector<8x1xf32> -> vector<8x1xf32>
    %139 = vector.broadcast %138 : vector<8x1xf32> to vector<8x8xf32>
    %140 = arith.mulf %135, %139 : vector<8x8xf32>
    %141 = arith.truncf %140 : vector<8x8xf32> to vector<8x8xbf16>
    %142 = arith.truncf %127 : vector<8x8xf32> to vector<8x8xbf16>
    %cst_92 = arith.constant dense<0.000000e+00> : vector<8x8xf32>
    %143 = tpu.matmul %141, %142, %cst_92 {dimension_numbers = #tpu.dot_dimension_numbers<[1], [0], [0], [1], [0, 0, 1, 1], [], []>} : vector<8x8xbf16>, vector<8x8xbf16>, vector<8x8xf32> -> vector<8x8xf32>
    %144 = arith.truncf %143 : vector<8x8xf32> to vector<8x8xbf16>
    %c2_93 = arith.constant 2 : index
    %c0_94 = arith.constant 0 : index
    %c0_95 = arith.constant 0 : index
    %145 = vector.load %arg10[%c2_93, %c0_94, %c0_95] : memref<4x8x32xbf16, #tpu.memory_space<vmem>>, vector<1x8x32xbf16>
    %146 = vector.shape_cast %145 : vector<1x8x32xbf16> to vector<8x32xbf16>
    %cst_96 = arith.constant dense<0.000000e+00> : vector<8x32xf32>
    %147 = tpu.matmul %144, %146, %cst_96 {dimension_numbers = #tpu.dot_dimension_numbers<[1], [0], [0], [1], [0, 0, 1, 1], [], []>} : vector<8x8xbf16>, vector<8x32xbf16>, vector<8x32xf32> -> vector<8x32xf32>
    %148 = arith.addf %104, %147 : vector<8x32xf32>
    %c3 = arith.constant 3 : index
    %c0_97 = arith.constant 0 : index
    %c0_98 = arith.constant 0 : index
    %149 = vector.load %arg4[%c3, %c0_97, %c0_98] : memref<4x32x8xbf16, #tpu.memory_space<vmem>>, vector<1x32x8xbf16>
    %150 = vector.shape_cast %149 : vector<1x32x8xbf16> to vector<32x8xbf16>
    %cst_99 = arith.constant dense<0.000000e+00> : vector<8x8xf32>
    %151 = tpu.matmul %15, %150, %cst_99 {dimension_numbers = #tpu.dot_dimension_numbers<[1], [0], [0], [1], [0, 0, 1, 1], [], []>} : vector<8x32xbf16>, vector<32x8xbf16>, vector<8x8xf32> -> vector<8x8xf32>
    %c3_100 = arith.constant 3 : index
    %c0_101 = arith.constant 0 : index
    %c0_102 = arith.constant 0 : index
    %152 = vector.load %arg5[%c3_100, %c0_101, %c0_102] : memref<4x1x8xf32, #tpu.memory_space<vmem>>, vector<1x1x8xf32>
    %153 = vector.shape_cast %152 : vector<1x1x8xf32> to vector<1x8xf32>
    %154 = vector.broadcast %153 : vector<1x8xf32> to vector<8x8xf32>
    %155 = arith.addf %151, %154 : vector<8x8xf32>
    %cst_103 = arith.constant 0.353553385 : f32
    %156 = vector.broadcast %cst_103 : f32 to vector<8x8xf32>
    %157 = arith.mulf %155, %156 : vector<8x8xf32>
    %c3_104 = arith.constant 3 : index
    %c0_105 = arith.constant 0 : index
    %c0_106 = arith.constant 0 : index
    %158 = vector.load %arg6[%c3_104, %c0_105, %c0_106] : memref<4x32x8xbf16, #tpu.memory_space<vmem>>, vector<1x32x8xbf16>
    %159 = vector.shape_cast %158 : vector<1x32x8xbf16> to vector<32x8xbf16>
    %cst_107 = arith.constant dense<0.000000e+00> : vector<8x8xf32>
    %160 = tpu.matmul %14, %159, %cst_107 {dimension_numbers = #tpu.dot_dimension_numbers<[1], [0], [0], [1], [0, 0, 1, 1], [], []>} : vector<8x32xbf16>, vector<32x8xbf16>, vector<8x8xf32> -> vector<8x8xf32>
    %c3_108 = arith.constant 3 : index
    %c0_109 = arith.constant 0 : index
    %c0_110 = arith.constant 0 : index
    %161 = vector.load %arg7[%c3_108, %c0_109, %c0_110] : memref<4x1x8xf32, #tpu.memory_space<vmem>>, vector<1x1x8xf32>
    %162 = vector.shape_cast %161 : vector<1x1x8xf32> to vector<1x8xf32>
    %163 = vector.broadcast %162 : vector<1x8xf32> to vector<8x8xf32>
    %164 = arith.addf %160, %163 : vector<8x8xf32>
    %c3_111 = arith.constant 3 : index
    %c0_112 = arith.constant 0 : index
    %c0_113 = arith.constant 0 : index
    %165 = vector.load %arg8[%c3_111, %c0_112, %c0_113] : memref<4x32x8xbf16, #tpu.memory_space<vmem>>, vector<1x32x8xbf16>
    %166 = vector.shape_cast %165 : vector<1x32x8xbf16> to vector<32x8xbf16>
    %cst_114 = arith.constant dense<0.000000e+00> : vector<8x8xf32>
    %167 = tpu.matmul %14, %166, %cst_114 {dimension_numbers = #tpu.dot_dimension_numbers<[1], [0], [0], [1], [0, 0, 1, 1], [], []>} : vector<8x32xbf16>, vector<32x8xbf16>, vector<8x8xf32> -> vector<8x8xf32>
    %c3_115 = arith.constant 3 : index
    %c0_116 = arith.constant 0 : index
    %c0_117 = arith.constant 0 : index
    %168 = vector.load %arg9[%c3_115, %c0_116, %c0_117] : memref<4x1x8xf32, #tpu.memory_space<vmem>>, vector<1x1x8xf32>
    %169 = vector.shape_cast %168 : vector<1x1x8xf32> to vector<1x8xf32>
    %170 = vector.broadcast %169 : vector<1x8xf32> to vector<8x8xf32>
    %171 = arith.addf %167, %170 : vector<8x8xf32>
    %172 = arith.truncf %157 : vector<8x8xf32> to vector<8x8xbf16>
    %173 = arith.truncf %164 : vector<8x8xf32> to vector<8x8xbf16>
    "tpu.trace_start"() <{level = 10 : i32, message = "qd,kd->qk"}> : () -> ()
    %cst_118 = arith.constant dense<0.000000e+00> : vector<8x8xf32>
    %174 = tpu.matmul %172, %173, %cst_118 {dimension_numbers = #tpu.dot_dimension_numbers<[1], [1], [0], [0], [0, 0, 1, 0], [], []>} : vector<8x8xbf16>, vector<8x8xbf16>, vector<8x8xf32> -> vector<8x8xf32>
    "tpu.trace_stop"() : () -> ()
    %cst_119 = arith.constant dense<0xFF800000> : vector<8xf32>
    %175 = vector.multi_reduction <maximumf>, %174, %cst_119 [1] : vector<8x8xf32> to vector<8xf32>
    %176 = vector.shape_cast %175 : vector<8xf32> to vector<8x1xf32>
    %177 = vector.broadcast %176 : vector<8x1xf32> to vector<8x8xf32>
    %178 = arith.subf %174, %177 : vector<8x8xf32>
    %179 = math.exp %178 : vector<8x8xf32>
    %cst_120 = arith.constant dense<0.000000e+00> : vector<8xf32>
    %180 = vector.multi_reduction <add>, %179, %cst_120 [1] : vector<8x8xf32> to vector<8xf32>
    %181 = vector.shape_cast %180 : vector<8xf32> to vector<8x1xf32>
    %182 = tpu.reciprocal %181 {approx = true} : vector<8x1xf32> -> vector<8x1xf32>
    %183 = vector.broadcast %182 : vector<8x1xf32> to vector<8x8xf32>
    %184 = arith.mulf %179, %183 : vector<8x8xf32>
    %185 = arith.truncf %184 : vector<8x8xf32> to vector<8x8xbf16>
    %186 = arith.truncf %171 : vector<8x8xf32> to vector<8x8xbf16>
    %cst_121 = arith.constant dense<0.000000e+00> : vector<8x8xf32>
    %187 = tpu.matmul %185, %186, %cst_121 {dimension_numbers = #tpu.dot_dimension_numbers<[1], [0], [0], [1], [0, 0, 1, 1], [], []>} : vector<8x8xbf16>, vector<8x8xbf16>, vector<8x8xf32> -> vector<8x8xf32>
    %188 = arith.truncf %187 : vector<8x8xf32> to vector<8x8xbf16>
    %c3_122 = arith.constant 3 : index
    %c0_123 = arith.constant 0 : index
    %c0_124 = arith.constant 0 : index
    %189 = vector.load %arg10[%c3_122, %c0_123, %c0_124] : memref<4x8x32xbf16, #tpu.memory_space<vmem>>, vector<1x8x32xbf16>
    %190 = vector.shape_cast %189 : vector<1x8x32xbf16> to vector<8x32xbf16>
    %cst_125 = arith.constant dense<0.000000e+00> : vector<8x32xf32>
    %191 = tpu.matmul %188, %190, %cst_125 {dimension_numbers = #tpu.dot_dimension_numbers<[1], [0], [0], [1], [0, 0, 1, 1], [], []>} : vector<8x8xbf16>, vector<8x32xbf16>, vector<8x32xf32> -> vector<8x32xf32>
    %192 = arith.addf %148, %191 : vector<8x32xf32>
    %c0_126 = arith.constant 0 : index
    %c0_127 = arith.constant 0 : index
    %193 = vector.load %arg11[%c0_126, %c0_127] : memref<1x32xf32, #tpu.memory_space<vmem>>, vector<1x32xf32>
    %194 = vector.shape_cast %193 : vector<1x32xf32> to vector<32xf32>
    %195 = vector.shape_cast %194 : vector<32xf32> to vector<1x32xf32>
    %196 = vector.broadcast %195 : vector<1x32xf32> to vector<8x32xf32>
    %197 = arith.addf %192, %196 : vector<8x32xf32>
    %198 = arith.addf %13, %197 : vector<8x32xf32>
    %c0_128 = arith.constant 0 : index
    %c0_129 = arith.constant 0 : index
    %199 = vector.load %arg16[%c0_128, %c0_129] : memref<1x32xf32, #tpu.memory_space<vmem>>, vector<1x32xf32>
    %200 = vector.shape_cast %199 : vector<1x32xf32> to vector<32xf32>
    %c0_130 = arith.constant 0 : index
    %c0_131 = arith.constant 0 : index
    %201 = vector.load %arg17[%c0_130, %c0_131] : memref<1x32xf32, #tpu.memory_space<vmem>>, vector<1x32xf32>
    %202 = vector.shape_cast %201 : vector<1x32xf32> to vector<32xf32>
    %cst_132 = arith.constant dense<0.000000e+00> : vector<8xf32>
    %203 = vector.multi_reduction <add>, %198, %cst_132 [1] : vector<8x32xf32> to vector<8xf32>
    %204 = vector.shape_cast %203 : vector<8xf32> to vector<8x1xf32>
    %cst_133 = arith.constant 3.200000e+01 : f32
    %205 = vector.broadcast %cst_133 : f32 to vector<8x1xf32>
    %206 = arith.divf %204, %205 : vector<8x1xf32>
    %207 = vector.broadcast %206 : vector<8x1xf32> to vector<8x32xf32>
    %208 = arith.subf %198, %207 : vector<8x32xf32>
    %209 = arith.mulf %208, %208 : vector<8x32xf32>
    %cst_134 = arith.constant dense<0.000000e+00> : vector<8xf32>
    %210 = vector.multi_reduction <add>, %209, %cst_134 [1] : vector<8x32xf32> to vector<8xf32>
    %211 = vector.shape_cast %210 : vector<8xf32> to vector<8x1xf32>
    %cst_135 = arith.constant 3.200000e+01 : f32
    %212 = vector.broadcast %cst_135 : f32 to vector<8x1xf32>
    %213 = arith.divf %211, %212 : vector<8x1xf32>
    %214 = vector.broadcast %206 : vector<8x1xf32> to vector<8x32xf32>
    %215 = arith.subf %198, %214 : vector<8x32xf32>
    %cst_136 = arith.constant 9.99999997E-7 : f32
    %216 = vector.broadcast %cst_136 : f32 to vector<8x1xf32>
    %217 = arith.addf %213, %216 : vector<8x1xf32>
    %218 = math.rsqrt %217 : vector<8x1xf32>
    %219 = vector.broadcast %218 : vector<8x1xf32> to vector<8x32xf32>
    %220 = arith.mulf %215, %219 : vector<8x32xf32>
    %221 = vector.shape_cast %200 : vector<32xf32> to vector<1x32xf32>
    %222 = vector.broadcast %221 : vector<1x32xf32> to vector<8x32xf32>
    %223 = arith.mulf %220, %222 : vector<8x32xf32>
    %224 = vector.shape_cast %202 : vector<32xf32> to vector<1x32xf32>
    %225 = vector.broadcast %224 : vector<1x32xf32> to vector<8x32xf32>
    %226 = arith.addf %223, %225 : vector<8x32xf32>
    %227 = arith.truncf %226 : vector<8x32xf32> to vector<8x32xbf16>
    %c0_137 = arith.constant 0 : index
    %c0_138 = arith.constant 0 : index
    %228 = vector.load %arg12[%c0_137, %c0_138] : memref<32x64xbf16, #tpu.memory_space<vmem>>, vector<32x64xbf16>
    %cst_139 = arith.constant dense<0.000000e+00> : vector<8x64xf32>
    %229 = tpu.matmul %227, %228, %cst_139 {dimension_numbers = #tpu.dot_dimension_numbers<[1], [0], [0], [1], [0, 0, 1, 1], [], []>} : vector<8x32xbf16>, vector<32x64xbf16>, vector<8x64xf32> -> vector<8x64xf32>
    %c0_140 = arith.constant 0 : index
    %c0_141 = arith.constant 0 : index
    %230 = vector.load %arg13[%c0_140, %c0_141] : memref<1x64xf32, #tpu.memory_space<vmem>>, vector<1x64xf32>
    %231 = vector.shape_cast %230 : vector<1x64xf32> to vector<64xf32>
    %232 = vector.shape_cast %231 : vector<64xf32> to vector<1x64xf32>
    %233 = vector.broadcast %232 : vector<1x64xf32> to vector<8x64xf32>
    %234 = arith.addf %229, %233 : vector<8x64xf32>
    %cst_142 = arith.constant 0.000000e+00 : f32
    %235 = vector.broadcast %cst_142 : f32 to vector<8x64xf32>
    %236 = arith.maximumf %234, %235 : vector<8x64xf32>
    %237 = arith.truncf %236 : vector<8x64xf32> to vector<8x64xbf16>
    %c0_143 = arith.constant 0 : index
    %c0_144 = arith.constant 0 : index
    %238 = vector.load %arg14[%c0_143, %c0_144] : memref<64x32xbf16, #tpu.memory_space<vmem>>, vector<64x32xbf16>
    %cst_145 = arith.constant dense<0.000000e+00> : vector<8x32xf32>
    %239 = tpu.matmul %237, %238, %cst_145 {dimension_numbers = #tpu.dot_dimension_numbers<[1], [0], [0], [1], [0, 0, 1, 1], [], []>} : vector<8x64xbf16>, vector<64x32xbf16>, vector<8x32xf32> -> vector<8x32xf32>
    %c0_146 = arith.constant 0 : index
    %c0_147 = arith.constant 0 : index
    %240 = vector.load %arg15[%c0_146, %c0_147] : memref<1x32xf32, #tpu.memory_space<vmem>>, vector<1x32xf32>
    %241 = vector.shape_cast %240 : vector<1x32xf32> to vector<32xf32>
    %242 = vector.shape_cast %241 : vector<32xf32> to vector<1x32xf32>
    %243 = vector.broadcast %242 : vector<1x32xf32> to vector<8x32xf32>
    %244 = arith.addf %239, %243 : vector<8x32xf32>
    %245 = arith.addf %226, %244 : vector<8x32xf32>
    %c0_148 = arith.constant 0 : index
    %c0_149 = arith.constant 0 : index
    %246 = vector.load %arg18[%c0_148, %c0_149] : memref<1x32xf32, #tpu.memory_space<vmem>>, vector<1x32xf32>
    %247 = vector.shape_cast %246 : vector<1x32xf32> to vector<32xf32>
    %c0_150 = arith.constant 0 : index
    %c0_151 = arith.constant 0 : index
    %248 = vector.load %arg19[%c0_150, %c0_151] : memref<1x32xf32, #tpu.memory_space<vmem>>, vector<1x32xf32>
    %249 = vector.shape_cast %248 : vector<1x32xf32> to vector<32xf32>
    %cst_152 = arith.constant dense<0.000000e+00> : vector<8xf32>
    %250 = vector.multi_reduction <add>, %245, %cst_152 [1] : vector<8x32xf32> to vector<8xf32>
    %251 = vector.shape_cast %250 : vector<8xf32> to vector<8x1xf32>
    %cst_153 = arith.constant 3.200000e+01 : f32
    %252 = vector.broadcast %cst_153 : f32 to vector<8x1xf32>
    %253 = arith.divf %251, %252 : vector<8x1xf32>
    %254 = vector.broadcast %253 : vector<8x1xf32> to vector<8x32xf32>
    %255 = arith.subf %245, %254 : vector<8x32xf32>
    %256 = arith.mulf %255, %255 : vector<8x32xf32>
    %cst_154 = arith.constant dense<0.000000e+00> : vector<8xf32>
    %257 = vector.multi_reduction <add>, %256, %cst_154 [1] : vector<8x32xf32> to vector<8xf32>
    %258 = vector.shape_cast %257 : vector<8xf32> to vector<8x1xf32>
    %cst_155 = arith.constant 3.200000e+01 : f32
    %259 = vector.broadcast %cst_155 : f32 to vector<8x1xf32>
    %260 = arith.divf %258, %259 : vector<8x1xf32>
    %261 = vector.broadcast %253 : vector<8x1xf32> to vector<8x32xf32>
    %262 = arith.subf %245, %261 : vector<8x32xf32>
    %cst_156 = arith.constant 9.99999997E-7 : f32
    %263 = vector.broadcast %cst_156 : f32 to vector<8x1xf32>
    %264 = arith.addf %260, %263 : vector<8x1xf32>
    %265 = math.rsqrt %264 : vector<8x1xf32>
    %266 = vector.broadcast %265 : vector<8x1xf32> to vector<8x32xf32>
    %267 = arith.mulf %262, %266 : vector<8x32xf32>
    %268 = vector.shape_cast %247 : vector<32xf32> to vector<1x32xf32>
    %269 = vector.broadcast %268 : vector<1x32xf32> to vector<8x32xf32>
    %270 = arith.mulf %267, %269 : vector<8x32xf32>
    %271 = vector.shape_cast %249 : vector<32xf32> to vector<1x32xf32>
    %272 = vector.broadcast %271 : vector<1x32xf32> to vector<8x32xf32>
    %273 = arith.addf %270, %272 : vector<8x32xf32>
    %c0_157 = arith.constant 0 : index
    %c0_158 = arith.constant 0 : index
    %c0_159 = arith.constant 0 : index
    %274 = vector.load %arg20[%c0_157, %c0_158, %c0_159] : memref<1x8x32xf32, #tpu.memory_space<vmem>>, vector<1x8x32xf32>
    %275 = vector.shape_cast %274 : vector<1x8x32xf32> to vector<8x32xf32>
    %276 = vector.shape_cast %273 : vector<8x32xf32> to vector<1x8x32xf32>
    tpu.vector_store %arg20[%c0_157, %c0_158, %c0_159], %276 {strides = array<i32>} : memref<1x8x32xf32, #tpu.memory_space<vmem>>, vector<1x8x32xf32>,
    return
  }
  func.func @transform_0(%arg0: i32, %arg1: i32) -> (i32, i32, i32) {
    %c0_i32 = arith.constant 0 : i32
    %c0_i32_0 = arith.constant 0 : i32
    %c0_i32_1 = arith.constant 0 : i32
    return %arg0, %c0_i32, %c0_i32_0 : i32, i32, i32
  }
  func.func @transform_1(%arg0: i32, %arg1: i32) -> (i32, i32, i32) {
    %c0_i32 = arith.constant 0 : i32
    %c0_i32_0 = arith.constant 0 : i32
    %c0_i32_1 = arith.constant 0 : i32
    %c0_i32_2 = arith.constant 0 : i32
    return %c0_i32, %c0_i32_0, %c0_i32_1 : i32, i32, i32
  }
  func.func @transform_2(%arg0: i32, %arg1: i32) -> (i32, i32, i32) {
    %c0_i32 = arith.constant 0 : i32
    %c0_i32_0 = arith.constant 0 : i32
    %c0_i32_1 = arith.constant 0 : i32
    %c0_i32_2 = arith.constant 0 : i32
    return %c0_i32, %c0_i32_0, %c0_i32_1 : i32, i32, i32
  }
  func.func @transform_3(%arg0: i32, %arg1: i32) -> (i32, i32, i32) {
    %c0_i32 = arith.constant 0 : i32
    %c0_i32_0 = arith.constant 0 : i32
    %c0_i32_1 = arith.constant 0 : i32
    %c0_i32_2 = arith.constant 0 : i32
    return %c0_i32, %c0_i32_0, %c0_i32_1 : i32, i32, i32
  }
  func.func @transform_4(%arg0: i32, %arg1: i32) -> (i32, i32, i32) {
    %c0_i32 = arith.constant 0 : i32
    %c0_i32_0 = arith.constant 0 : i32
    %c0_i32_1 = arith.constant 0 : i32
    %c0_i32_2 = arith.constant 0 : i32
    return %c0_i32, %c0_i32_0, %c0_i32_1 : i32, i32, i32
  }
  func.func @transform_5(%arg0: i32, %arg1: i32) -> (i32, i32, i32) {
    %c0_i32 = arith.constant 0 : i32
    %c0_i32_0 = arith.constant 0 : i32
    %c0_i32_1 = arith.constant 0 : i32
    %c0_i32_2 = arith.constant 0 : i32
    return %c0_i32, %c0_i32_0, %c0_i32_1 : i32, i32, i32
  }
  func.func @transform_6(%arg0: i32, %arg1: i32) -> (i32, i32, i32) {
    %c0_i32 = arith.constant 0 : i32
    %c0_i32_0 = arith.constant 0 : i32
    %c0_i32_1 = arith.constant 0 : i32
    %c0_i32_2 = arith.constant 0 : i32
    return %c0_i32, %c0_i32_0, %c0_i32_1 : i32, i32, i32
  }
  func.func @transform_7(%arg0: i32, %arg1: i32) -> (i32, i32, i32) {
    %c0_i32 = arith.constant 0 : i32
    %c0_i32_0 = arith.constant 0 : i32
    %c0_i32_1 = arith.constant 0 : i32
    %c0_i32_2 = arith.constant 0 : i32
    return %c0_i32, %c0_i32_0, %c0_i32_1 : i32, i32, i32
  }
  func.func @transform_8(%arg0: i32, %arg1: i32) -> (i32, i32, i32) {
    %c0_i32 = arith.constant 0 : i32
    %c0_i32_0 = arith.constant 0 : i32
    %c0_i32_1 = arith.constant 0 : i32
    %c0_i32_2 = arith.constant 0 : i32
    return %c0_i32, %c0_i32_0, %c0_i32_1 : i32, i32, i32
  }
  func.func @transform_9(%arg0: i32, %arg1: i32) -> (i32, i32) {
    %c0_i32 = arith.constant 0 : i32
    %c0_i32_0 = arith.constant 0 : i32
    %c0_i32_1 = arith.constant 0 : i32
    return %c0_i32, %c0_i32_0 : i32, i32
  }
  func.func @transform_10(%arg0: i32, %arg1: i32) -> (i32, i32) {
    %c0_i32 = arith.constant 0 : i32
    %c0_i32_0 = arith.constant 0 : i32
    %c0_i32_1 = arith.constant 0 : i32
    return %c0_i32, %c0_i32_0 : i32, i32
  }
  func.func @transform_11(%arg0: i32, %arg1: i32) -> (i32, i32) {
    %c0_i32 = arith.constant 0 : i32
    %c0_i32_0 = arith.constant 0 : i32
    %c0_i32_1 = arith.constant 0 : i32
    return %c0_i32, %c0_i32_0 : i32, i32
  }
  func.func @transform_12(%arg0: i32, %arg1: i32) -> (i32, i32) {
    %c0_i32 = arith.constant 0 : i32
    %c0_i32_0 = arith.constant 0 : i32
    %c0_i32_1 = arith.constant 0 : i32
    return %c0_i32, %c0_i32_0 : i32, i32
  }
  func.func @transform_13(%arg0: i32, %arg1: i32) -> (i32, i32) {
    %c0_i32 = arith.constant 0 : i32
    %c0_i32_0 = arith.constant 0 : i32
    %c0_i32_1 = arith.constant 0 : i32
    return %c0_i32, %c0_i32_0 : i32, i32
  }
  func.func @transform_14(%arg0: i32, %arg1: i32) -> (i32, i32) {
    %c0_i32 = arith.constant 0 : i32
    %c0_i32_0 = arith.constant 0 : i32
    %c0_i32_1 = arith.constant 0 : i32
    return %c0_i32, %c0_i32_0 : i32, i32
  }
  func.func @transform_15(%arg0: i32, %arg1: i32) -> (i32, i32) {
    %c0_i32 = arith.constant 0 : i32
    %c0_i32_0 = arith.constant 0 : i32
    %c0_i32_1 = arith.constant 0 : i32
    return %c0_i32, %c0_i32_0 : i32, i32
  }
  func.func @transform_16(%arg0: i32, %arg1: i32) -> (i32, i32) {
    %c0_i32 = arith.constant 0 : i32
    %c0_i32_0 = arith.constant 0 : i32
    %c0_i32_1 = arith.constant 0 : i32
    return %c0_i32, %c0_i32_0 : i32, i32
  }
  func.func @transform_17(%arg0: i32, %arg1: i32) -> (i32, i32) {
    %c0_i32 = arith.constant 0 : i32
    %c0_i32_0 = arith.constant 0 : i32
    %c0_i32_1 = arith.constant 0 : i32
    return %c0_i32, %c0_i32_0 : i32, i32
  }
  func.func @transform_18(%arg0: i32, %arg1: i32) -> (i32, i32, i32) {
    %c0_i32 = arith.constant 0 : i32
    %c0_i32_0 = arith.constant 0 : i32
    return %arg0, %arg1, %c0_i32 : i32, i32, i32
  }
}

</mosaic_0001>

<llo_original>
// kernel: tpu_custom_call.1
$region0: #{tpu_custom_call.1}
  #allocation0 [shape = 'u32[]', space=smem, size = 0x4, offset = 0x4, fixed_abs, tag = 'smem constant byte address 0x4 - core index']
  #allocation1 [shape = 'u32[144,128]{1,0:T(1,128)}', space=vmem, size = 0x12000, scoped, tag = 'internal scratch']
  %s0 = inlined_call_operand.vmem [shape: f32[2,8,32], index: 0, kind: input, shape index: {}]
  %s1 = inlined_call_operand.vmem [shape: f32[1,8,32], index: 1, kind: input, shape index: {}]
  %s2 = inlined_call_operand.vmem [shape: bf16[4,32,8], index: 2, kind: input, shape index: {}]
  %s3 = inlined_call_operand.vmem [shape: f32[4,1,8], index: 3, kind: input, shape index: {}]
  %s4 = inlined_call_operand.vmem [shape: bf16[4,32,8], index: 4, kind: input, shape index: {}]
  %s5 = inlined_call_operand.vmem [shape: f32[4,1,8], index: 5, kind: input, shape index: {}]
  %s6 = inlined_call_operand.vmem [shape: bf16[4,32,8], index: 6, kind: input, shape index: {}]
  %s7 = inlined_call_operand.vmem [shape: f32[4,1,8], index: 7, kind: input, shape index: {}]
  %s8 = inlined_call_operand.vmem [shape: bf16[4,8,32], index: 8, kind: input, shape index: {}]
  %s9 = inlined_call_operand.vmem [shape: f32[1,32], index: 9, kind: input, shape index: {}]
  %s10 = inlined_call_operand.vmem [shape: bf16[32,64], index: 10, kind: input, shape index: {}]
  %s11 = inlined_call_operand.vmem [shape: f32[1,64], index: 11, kind: input, shape index: {}]
  %s12 = inlined_call_operand.vmem [shape: bf16[64,32], index: 12, kind: input, shape index: {}]
  %s13 = inlined_call_operand.vmem [shape: f32[1,32], index: 13, kind: input, shape index: {}]
  %s14 = inlined_call_operand.vmem [shape: f32[1,32], index: 14, kind: input, shape index: {}]
  %s15 = inlined_call_operand.vmem [shape: f32[1,32], index: 15, kind: input, shape index: {}]
  %s16 = inlined_call_operand.vmem [shape: f32[1,32], index: 16, kind: input, shape index: {}]
  %s17 = inlined_call_operand.vmem [shape: f32[1,32], index: 17, kind: input, shape index: {}]
  %s18 = inlined_call_operand.hbm [shape: f32[2,8,32], index: 18, kind: output, shape index: {}]
  %s19 = sld [smem:[#allocation0]]
  $region105: #{tpu_custom_call.1} parent=0
    _
  %s21 = ssub.s32 1, %s19
  %s22 = scalar_select 0, %s21, %s19
  $region1: #{tpu_custom_call.1} parent=0
    #allocation2 [shape = 'u8[8192]{0}', space=vmem, size = 0x2000, scoped, tag = 'output window, operand 0']
    #allocation3 [shape = 's32[2]{0}', space=sflag, size = 0x8, scoped, tag = 'scoped memory for tpu_custom_call.1']
    %23 = vsyncpa [#allocation3], 0
    %s24 = scalar_lea.sflag [#allocation3], 1
    %25 = vsyncpa %s24, 0
    loop: start=0, step=1, limit=4
    $region2: #{tpu_custom_call.1} parent=1 // loop_pre_header
      _
    $region3: #{tpu_custom_call.1} parent=1 // loop_header
      %s27 = sphi 0, %s31
      %p28 = scmp.ge.s32.totalorder %s27, 4
      %s34 = sphi 0, %s46
      %s35 = sphi 0, %s42
      %s36 = sphi 0, %s34
      %s37 = sphi 0, %s35
      %s38 = sphi 0, %s36
      %s39 = sphi 0, %s37
      %s49 = sphi 0, %s51
      %s52 = sphi 0, %s49
      %s53 = sphi 0, %s52
      %s69 = sphi 0, %s53
      %s73 = sphi 0, %s73
      %s75 = sphi 0, %s73
      %s76 = sphi 0, %s75
      %s90 = sphi 0, %s76
      %s94 = sphi 0, %s94
      %s96 = sphi 0, %s94
      %s97 = sphi 0, %s96
      %s111 = sphi 0, %s97
      %s115 = sphi 0, %s115
      %s117 = sphi 0, %s115
      %s118 = sphi 0, %s117
      %s132 = sphi 0, %s118
      %s136 = sphi 0, %s136
      %s138 = sphi 0, %s136
      %s139 = sphi 0, %s138
      %s153 = sphi 0, %s139
      %s157 = sphi 0, %s157
      %s159 = sphi 0, %s157
      %s160 = sphi 0, %s159
      %s174 = sphi 0, %s160
      %s178 = sphi 0, %s178
      %s180 = sphi 0, %s178
      %s181 = sphi 0, %s180
      %s195 = sphi 0, %s181
      %s199 = sphi 0, %s199
      %s201 = sphi 0, %s199
      %s202 = sphi 0, %s201
      %s216 = sphi 0, %s202
      %s220 = sphi 0, %s220
      %s222 = sphi 0, %s220
      %s223 = sphi 0, %s222
      %s237 = sphi 0, %s223
      %s241 = sphi 0, %s241
      %s243 = sphi 0, %s241
      %s244 = sphi 0, %s243
      %s258 = sphi 0, %s244
      %s262 = sphi 0, %s262
      %s264 = sphi 0, %s262
      %s265 = sphi 0, %s264
      %s279 = sphi 0, %s265
      %s283 = sphi 0, %s283
      %s285 = sphi 0, %s283
      %s286 = sphi 0, %s285
      %s300 = sphi 0, %s286
      %s304 = sphi 0, %s304
      %s306 = sphi 0, %s304
      %s307 = sphi 0, %s306
      %s321 = sphi 0, %s307
      %s325 = sphi 0, %s325
      %s327 = sphi 0, %s325
      %s328 = sphi 0, %s327
      %s342 = sphi 0, %s328
      %s346 = sphi 0, %s346
      %s348 = sphi 0, %s346
      %s349 = sphi 0, %s348
      %s363 = sphi 0, %s349
      %s367 = sphi 0, %s367
      %s369 = sphi 0, %s367
      %s370 = sphi 0, %s369
      %s384 = sphi 0, %s370
      %s388 = sphi 0, %s388
      %s390 = sphi 0, %s388
      %s391 = sphi 0, %s390
      %s405 = sphi 0, %s391
      %s409 = sphi 0, %s409
      %s411 = sphi 0, %s409
      %s412 = sphi 0, %s411
      %s426 = sphi 0, %s412
      %s434 = sphi 0, %s436
      %s437 = sphi 0, %s434
      %s438 = sphi 0, %s437
      %s454 = sphi 0, %s438
    $region4: #{tpu_custom_call.1} parent=1 // loop_header_branch
      %30 = sbr.rel (%p28) target = $region8
    $region5: #{tpu_custom_call.1} parent=1 // loop_body
      %s32 = ssub.s32 %s27, 1
      %s33 = ssub.s32 %s27, 2
      %s40 = sadd.s32 1, %s35
      %p41 = scmp.ge.s32.totalorder %s40, 1
      %s42 = scalar_select %p41, 0, %s40
      %s43 = sadd.s32 1, %s34
      %s44 = scalar_select %p41, %s43, %s34
      %p45 = scmp.ge.s32.totalorder %s44, 2
      %s46 = scalar_select %p45, 0, %s44
      %s47 = ssub.s32 %s34, %s46
      %p48 = scmp.eq.s32.totalorder %s47, 0
      %s50 = sadd.s32 %s49, 1
      %s51 = scalar_select %p48, %s49, %s50
      %p54 = pneg %p48
      %p55 = scmp.eq.s32.totalorder %s27, 1
      %p56 = por %p54, %p55
      %p57 = scmp.ne.s32.totalorder %s49, %s52
      %p58 = scmp.eq.s32.totalorder %s27, 0
      %p59 = por %p57, %p58
      %p60 = scmp.ne.s32.totalorder %s49, %s52
      %p61 = scmp.eq.s32.totalorder %s32, 1
      %p62 = por %p60, %p61
      %p63 = scmp.ne.s32.totalorder %s52, %s53
      %p64 = scmp.eq.s32.totalorder %s32, 0
      %p65 = por %p63, %p64
      %p66 = scmp.ne.s32.totalorder %s52, %s53
      %p67 = scmp.eq.s32.totalorder %s33, 1
      %p68 = por %p66, %p67
      %p70 = scmp.ne.s32.totalorder %s53, %s69
      %p71 = scmp.eq.s32.totalorder %s33, 0
      %p72 = por %p70, %p71
      %s74 = sadd.s32 %s73, 1
      %p77 = scmp.eq.s32.totalorder %s27, 1
      %p78 = scmp.ne.s32.totalorder %s73, %s75
      %p79 = scmp.eq.s32.totalorder %s27, 0
      %p80 = por %p78, %p79
      %p81 = scmp.ne.s32.totalorder %s73, %s75
      %p82 = scmp.eq.s32.totalorder %s32, 1
      %p83 = por %p81, %p82
      %p84 = scmp.ne.s32.totalorder %s75, %s76
      %p85 = scmp.eq.s32.totalorder %s32, 0
      %p86 = por %p84, %p85
      %p87 = scmp.ne.s32.totalorder %s75, %s76
      %p88 = scmp.eq.s32.totalorder %s33, 1
      %p89 = por %p87, %p88
      %p91 = scmp.ne.s32.totalorder %s76, %s90
      %p92 = scmp.eq.s32.totalorder %s33, 0
      %p93 = por %p91, %p92
      %s95 = sadd.s32 %s94, 1
      %p98 = scmp.eq.s32.totalorder %s27, 1
      %p99 = scmp.ne.s32.totalorder %s94, %s96
      %p100 = scmp.eq.s32.totalorder %s27, 0
      %p101 = por %p99, %p100
      %p102 = scmp.ne.s32.totalorder %s94, %s96
      %p103 = scmp.eq.s32.totalorder %s32, 1
      %p104 = por %p102, %p103
      %p105 = scmp.ne.s32.totalorder %s96, %s97
      %p106 = scmp.eq.s32.totalorder %s32, 0
      %p107 = por %p105, %p106
      %p108 = scmp.ne.s32.totalorder %s96, %s97
      %p109 = scmp.eq.s32.totalorder %s33, 1
      %p110 = por %p108, %p109
      %p112 = scmp.ne.s32.totalorder %s97, %s111
      %p113 = scmp.eq.s32.totalorder %s33, 0
      %p114 = por %p112, %p113
      %s116 = sadd.s32 %s115, 1
      %p119 = scmp.eq.s32.totalorder %s27, 1
      %p120 = scmp.ne.s32.totalorder %s115, %s117
      %p121 = scmp.eq.s32.totalorder %s27, 0
      %p122 = por %p120, %p121
      %p123 = scmp.ne.s32.totalorder %s115, %s117
      %p124 = scmp.eq.s32.totalorder %s32, 1
      %p125 = por %p123, %p124
      %p126 = scmp.ne.s32.totalorder %s117, %s118
      %p127 = scmp.eq.s32.totalorder %s32, 0
      %p128 = por %p126, %p127
      %p129 = scmp.ne.s32.totalorder %s117, %s118
      %p130 = scmp.eq.s32.totalorder %s33, 1
      %p131 = por %p129, %p130
      %p133 = scmp.ne.s32.totalorder %s118, %s132
      %p134 = scmp.eq.s32.totalorder %s33, 0
      %p135 = por %p133, %p134
      %s137 = sadd.s32 %s136, 1
      %p140 = scmp.eq.s32.totalorder %s27, 1
      %p141 = scmp.ne.s32.totalorder %s136, %s138
      %p142 = scmp.eq.s32.totalorder %s27, 0
      %p143 = por %p141, %p142
      %p144 = scmp.ne.s32.totalorder %s136, %s138
      %p145 = scmp.eq.s32.totalorder %s32, 1
      %p146 = por %p144, %p145
      %p147 = scmp.ne.s32.totalorder %s138, %s139
      %p148 = scmp.eq.s32.totalorder %s32, 0
      %p149 = por %p147, %p148
      %p150 = scmp.ne.s32.totalorder %s138, %s139
      %p151 = scmp.eq.s32.totalorder %s33, 1
      %p152 = por %p150, %p151
      %p154 = scmp.ne.s32.totalorder %s139, %s153
      %p155 = scmp.eq.s32.totalorder %s33, 0
      %p156 = por %p154, %p155
      %s158 = sadd.s32 %s157, 1
      %p161 = scmp.eq.s32.totalorder %s27, 1
      %p162 = scmp.ne.s32.totalorder %s157, %s159
      %p163 = scmp.eq.s32.totalorder %s27, 0
      %p164 = por %p162, %p163
      %p165 = scmp.ne.s32.totalorder %s157, %s159
      %p166 = scmp.eq.s32.totalorder %s32, 1
      %p167 = por %p165, %p166
      %p168 = scmp.ne.s32.totalorder %s159, %s160
      %p169 = scmp.eq.s32.totalorder %s32, 0
      %p170 = por %p168, %p169
      %p171 = scmp.ne.s32.totalorder %s159, %s160
      %p172 = scmp.eq.s32.totalorder %s33, 1
      %p173 = por %p171, %p172
      %p175 = scmp.ne.s32.totalorder %s160, %s174
      %p176 = scmp.eq.s32.totalorder %s33, 0
      %p177 = por %p175, %p176
      %s179 = sadd.s32 %s178, 1
      %p182 = scmp.eq.s32.totalorder %s27, 1
      %p183 = scmp.ne.s32.totalorder %s178, %s180
      %p184 = scmp.eq.s32.totalorder %s27, 0
      %p185 = por %p183, %p184
      %p186 = scmp.ne.s32.totalorder %s178, %s180
      %p187 = scmp.eq.s32.totalorder %s32, 1
      %p188 = por %p186, %p187
      %p189 = scmp.ne.s32.totalorder %s180, %s181
      %p190 = scmp.eq.s32.totalorder %s32, 0
      %p191 = por %p189, %p190
      %p192 = scmp.ne.s32.totalorder %s180, %s181
      %p193 = scmp.eq.s32.totalorder %s33, 1
      %p194 = por %p192, %p193
      %p196 = scmp.ne.s32.totalorder %s181, %s195
      %p197 = scmp.eq.s32.totalorder %s33, 0
      %p198 = por %p196, %p197
      %s200 = sadd.s32 %s199, 1
      %p203 = scmp.eq.s32.totalorder %s27, 1
      %p204 = scmp.ne.s32.totalorder %s199, %s201
      %p205 = scmp.eq.s32.totalorder %s27, 0
      %p206 = por %p204, %p205
      %p207 = scmp.ne.s32.totalorder %s199, %s201
      %p208 = scmp.eq.s32.totalorder %s32, 1
      %p209 = por %p207, %p208
      %p210 = scmp.ne.s32.totalorder %s201, %s202
      %p211 = scmp.eq.s32.totalorder %s32, 0
      %p212 = por %p210, %p211
      %p213 = scmp.ne.s32.totalorder %s201, %s202
      %p214 = scmp.eq.s32.totalorder %s33, 1
      %p215 = por %p213, %p214
      %p217 = scmp.ne.s32.totalorder %s202, %s216
      %p218 = scmp.eq.s32.totalorder %s33, 0
      %p219 = por %p217, %p218
      %s221 = sadd.s32 %s220, 1
      %p224 = scmp.eq.s32.totalorder %s27, 1
      %p225 = scmp.ne.s32.totalorder %s220, %s222
      %p226 = scmp.eq.s32.totalorder %s27, 0
      %p227 = por %p225, %p226
      %p228 = scmp.ne.s32.totalorder %s220, %s222
      %p229 = scmp.eq.s32.totalorder %s32, 1
      %p230 = por %p228, %p229
      %p231 = scmp.ne.s32.totalorder %s222, %s223
      %p232 = scmp.eq.s32.totalorder %s32, 0
      %p233 = por %p231, %p232
      %p234 = scmp.ne.s32.totalorder %s222, %s223
      %p235 = scmp.eq.s32.totalorder %s33, 1
      %p236 = por %p234, %p235
      %p238 = scmp.ne.s32.totalorder %s223, %s237
      %p239 = scmp.eq.s32.totalorder %s33, 0
      %p240 = por %p238, %p239
      %s242 = sadd.s32 %s241, 1
      %p245 = scmp.eq.s32.totalorder %s27, 1
      %p246 = scmp.ne.s32.totalorder %s241, %s243
      %p247 = scmp.eq.s32.totalorder %s27, 0
      %p248 = por %p246, %p247
      %p249 = scmp.ne.s32.totalorder %s241, %s243
      %p250 = scmp.eq.s32.totalorder %s32, 1
      %p251 = por %p249, %p250
      %p252 = scmp.ne.s32.totalorder %s243, %s244
      %p253 = scmp.eq.s32.totalorder %s32, 0
      %p254 = por %p252, %p253
      %p255 = scmp.ne.s32.totalorder %s243, %s244
      %p256 = scmp.eq.s32.totalorder %s33, 1
      %p257 = por %p255, %p256
      %p259 = scmp.ne.s32.totalorder %s244, %s258
      %p260 = scmp.eq.s32.totalorder %s33, 0
      %p261 = por %p259, %p260
      %s263 = sadd.s32 %s262, 1
      %p266 = scmp.eq.s32.totalorder %s27, 1
      %p267 = scmp.ne.s32.totalorder %s262, %s264
      %p268 = scmp.eq.s32.totalorder %s27, 0
      %p269 = por %p267, %p268
      %p270 = scmp.ne.s32.totalorder %s262, %s264
      %p271 = scmp.eq.s32.totalorder %s32, 1
      %p272 = por %p270, %p271
      %p273 = scmp.ne.s32.totalorder %s264, %s265
      %p274 = scmp.eq.s32.totalorder %s32, 0
      %p275 = por %p273, %p274
      %p276 = scmp.ne.s32.totalorder %s264, %s265
      %p277 = scmp.eq.s32.totalorder %s33, 1
      %p278 = por %p276, %p277
      %p280 = scmp.ne.s32.totalorder %s265, %s279
      %p281 = scmp.eq.s32.totalorder %s33, 0
      %p282 = por %p280, %p281
      %s284 = sadd.s32 %s283, 1
      %p287 = scmp.eq.s32.totalorder %s27, 1
      %p288 = scmp.ne.s32.totalorder %s283, %s285
      %p289 = scmp.eq.s32.totalorder %s27, 0
      %p290 = por %p288, %p289
      %p291 = scmp.ne.s32.totalorder %s283, %s285
      %p292 = scmp.eq.s32.totalorder %s32, 1
      %p293 = por %p291, %p292
      %p294 = scmp.ne.s32.totalorder %s285, %s286
      %p295 = scmp.eq.s32.totalorder %s32, 0
      %p296 = por %p294, %p295
      %p297 = scmp.ne.s32.totalorder %s285, %s286
      %p298 = scmp.eq.s32.totalorder %s33, 1
      %p299 = por %p297, %p298
      %p301 = scmp.ne.s32.totalorder %s286, %s300
      %p302 = scmp.eq.s32.totalorder %s33, 0
      %p303 = por %p301, %p302
      %s305 = sadd.s32 %s304, 1
      %p308 = scmp.eq.s32.totalorder %s27, 1
      %p309 = scmp.ne.s32.totalorder %s304, %s306
      %p310 = scmp.eq.s32.totalorder %s27, 0
      %p311 = por %p309, %p310
      %p312 = scmp.ne.s32.totalorder %s304, %s306
      %p313 = scmp.eq.s32.totalorder %s32, 1
      %p314 = por %p312, %p313
      %p315 = scmp.ne.s32.totalorder %s306, %s307
      %p316 = scmp.eq.s32.totalorder %s32, 0
      %p317 = por %p315, %p316
      %p318 = scmp.ne.s32.totalorder %s306, %s307
      %p319 = scmp.eq.s32.totalorder %s33, 1
      %p320 = por %p318, %p319
      %p322 = scmp.ne.s32.totalorder %s307, %s321
      %p323 = scmp.eq.s32.totalorder %s33, 0
      %p324 = por %p322, %p323
      %s326 = sadd.s32 %s325, 1
      %p329 = scmp.eq.s32.totalorder %s27, 1
      %p330 = scmp.ne.s32.totalorder %s325, %s327
      %p331 = scmp.eq.s32.totalorder %s27, 0
      %p332 = por %p330, %p331
      %p333 = scmp.ne.s32.totalorder %s325, %s327
      %p334 = scmp.eq.s32.totalorder %s32, 1
      %p335 = por %p333, %p334
      %p336 = scmp.ne.s32.totalorder %s327, %s328
      %p337 = scmp.eq.s32.totalorder %s32, 0
      %p338 = por %p336, %p337
      %p339 = scmp.ne.s32.totalorder %s327, %s328
      %p340 = scmp.eq.s32.totalorder %s33, 1
      %p341 = por %p339, %p340
      %p343 = scmp.ne.s32.totalorder %s328, %s342
      %p344 = scmp.eq.s32.totalorder %s33, 0
      %p345 = por %p343, %p344
      %s347 = sadd.s32 %s346, 1
      %p350 = scmp.eq.s32.totalorder %s27, 1
      %p351 = scmp.ne.s32.totalorder %s346, %s348
      %p352 = scmp.eq.s32.totalorder %s27, 0
      %p353 = por %p351, %p352
      %p354 = scmp.ne.s32.totalorder %s346, %s348
      %p355 = scmp.eq.s32.totalorder %s32, 1
      %p356 = por %p354, %p355
      %p357 = scmp.ne.s32.totalorder %s348, %s349
      %p358 = scmp.eq.s32.totalorder %s32, 0
      %p359 = por %p357, %p358
      %p360 = scmp.ne.s32.totalorder %s348, %s349
      %p361 = scmp.eq.s32.totalorder %s33, 1
      %p362 = por %p360, %p361
      %p364 = scmp.ne.s32.totalorder %s349, %s363
      %p365 = scmp.eq.s32.totalorder %s33, 0
      %p366 = por %p364, %p365
      %s368 = sadd.s32 %s367, 1
      %p371 = scmp.eq.s32.totalorder %s27, 1
      %p372 = scmp.ne.s32.totalorder %s367, %s369
      %p373 = scmp.eq.s32.totalorder %s27, 0
      %p374 = por %p372, %p373
      %p375 = scmp.ne.s32.totalorder %s367, %s369
      %p376 = scmp.eq.s32.totalorder %s32, 1
      %p377 = por %p375, %p376
      %p378 = scmp.ne.s32.totalorder %s369, %s370
      %p379 = scmp.eq.s32.totalorder %s32, 0
      %p380 = por %p378, %p379
      %p381 = scmp.ne.s32.totalorder %s369, %s370
      %p382 = scmp.eq.s32.totalorder %s33, 1
      %p383 = por %p381, %p382
      %p385 = scmp.ne.s32.totalorder %s370, %s384
      %p386 = scmp.eq.s32.totalorder %s33, 0
      %p387 = por %p385, %p386
      %s389 = sadd.s32 %s388, 1
      %p392 = scmp.eq.s32.totalorder %s27, 1
      %p393 = scmp.ne.s32.totalorder %s388, %s390
      %p394 = scmp.eq.s32.totalorder %s27, 0
      %p395 = por %p393, %p394
      %p396 = scmp.ne.s32.totalorder %s388, %s390
      %p397 = scmp.eq.s32.totalorder %s32, 1
      %p398 = por %p396, %p397
      %p399 = scmp.ne.s32.totalorder %s390, %s391
      %p400 = scmp.eq.s32.totalorder %s32, 0
      %p401 = por %p399, %p400
      %p402 = scmp.ne.s32.totalorder %s390, %s391
      %p403 = scmp.eq.s32.totalorder %s33, 1
      %p404 = por %p402, %p403
      %p406 = scmp.ne.s32.totalorder %s391, %s405
      %p407 = scmp.eq.s32.totalorder %s33, 0
      %p408 = por %p406, %p407
      %s410 = sadd.s32 %s409, 1
      %p413 = scmp.eq.s32.totalorder %s27, 1
      %p414 = scmp.ne.s32.totalorder %s409, %s411
      %p415 = scmp.eq.s32.totalorder %s27, 0
      %p416 = por %p414, %p415
      %p417 = scmp.ne.s32.totalorder %s409, %s411
      %p418 = scmp.eq.s32.totalorder %s32, 1
      %p419 = por %p417, %p418
      %p420 = scmp.ne.s32.totalorder %s411, %s412
      %p421 = scmp.eq.s32.totalorder %s32, 0
      %p422 = por %p420, %p421
      %p423 = scmp.ne.s32.totalorder %s411, %s412
      %p424 = scmp.eq.s32.totalorder %s33, 1
      %p425 = por %p423, %p424
      %p427 = scmp.ne.s32.totalorder %s412, %s426
      %p428 = scmp.eq.s32.totalorder %s33, 0
      %p429 = por %p427, %p428
      %s430 = ssub.s32 %s34, %s46
      %s431 = ssub.s32 %s35, %s42
      %s432 = sor.u32 %s430, %s431
      %p433 = scmp.eq.s32.totalorder %s432, 0
      %s435 = sadd.s32 %s434, 1
      %s436 = scalar_select %p433, %s434, %s435
      %p439 = pneg %p433
      %p440 = scmp.eq.s32.totalorder %s27, 1
      %p441 = por %p439, %p440
      %p442 = scmp.ne.s32.totalorder %s434, %s437
      %p443 = scmp.eq.s32.totalorder %s27, 0
      %p444 = por %p442, %p443
      %p445 = scmp.ne.s32.totalorder %s434, %s437
      %p446 = scmp.eq.s32.totalorder %s32, 1
      %p447 = por %p445, %p446
      %p448 = scmp.ne.s32.totalorder %s437, %s438
      %p449 = scmp.eq.s32.totalorder %s32, 0
      %p450 = por %p448, %p449
      %p451 = scmp.ne.s32.totalorder %s437, %s438
      %p452 = scmp.eq.s32.totalorder %s33, 1
      %p453 = por %p451, %p452
      %p455 = scmp.ne.s32.totalorder %s438, %s454
      %p456 = scmp.eq.s32.totalorder %s33, 0
      %p457 = por %p455, %p456
      %p458 = scmp.le.s32.totalorder 1, %s27
      %p459 = scmp.lt.s32.totalorder %s27, 3
      %p460 = pnand %p458, %p459
      %p461 = pneg %p460
      // Predicated region
      $region9: #{tpu_custom_call.1} parent=5 // pred_check
        _
      $region10: #{tpu_custom_call.1} parent=5 // pred_check_branch
        %463 = sbr.rel (%p460) target = $region12
      $region11: #{tpu_custom_call.1} parent=5 // pred_region
        %s464 = ssub.s32 %s27, 1
        // Predicated region
        $region13: #{tpu_custom_call.1} parent=11 // pred_check
          %p465 = pneg %p86
        $region14: #{tpu_custom_call.1} parent=11 // pred_check_branch
          %467 = sbr.rel (%p465) target = $region16
        $region15: #{tpu_custom_call.1} parent=11 // pred_region
          _
        $region16: #{tpu_custom_call.1} parent=11 // pred_fallthru
          _
        // Predicated region
        $region17: #{tpu_custom_call.1} parent=11 // pred_check
          %p468 = pneg %p107
        $region18: #{tpu_custom_call.1} parent=11 // pred_check_branch
          %470 = sbr.rel (%p468) target = $region20
        $region19: #{tpu_custom_call.1} parent=11 // pred_region
          _
        $region20: #{tpu_custom_call.1} parent=11 // pred_fallthru
          _
        // Predicated region
        $region21: #{tpu_custom_call.1} parent=11 // pred_check
          %p471 = pneg %p128
        $region22: #{tpu_custom_call.1} parent=11 // pred_check_branch
          %473 = sbr.rel (%p471) target = $region24
        $region23: #{tpu_custom_call.1} parent=11 // pred_region
          _
        $region24: #{tpu_custom_call.1} parent=11 // pred_fallthru
          _
        // Predicated region
        $region25: #{tpu_custom_call.1} parent=11 // pred_check
          %p474 = pneg %p149
        $region26: #{tpu_custom_call.1} parent=11 // pred_check_branch
          %476 = sbr.rel (%p474) target = $region28
        $region27: #{tpu_custom_call.1} parent=11 // pred_region
          _
        $region28: #{tpu_custom_call.1} parent=11 // pred_fallthru
          _
        // Predicated region
        $region29: #{tpu_custom_call.1} parent=11 // pred_check
          %p477 = pneg %p170
        $region30: #{tpu_custom_call.1} parent=11 // pred_check_branch
          %479 = sbr.rel (%p477) target = $region32
        $region31: #{tpu_custom_call.1} parent=11 // pred_region
          _
        $region32: #{tpu_custom_call.1} parent=11 // pred_fallthru
          _
        // Predicated region
        $region33: #{tpu_custom_call.1} parent=11 // pred_check
          %p480 = pneg %p191
        $region34: #{tpu_custom_call.1} parent=11 // pred_check_branch
          %482 = sbr.rel (%p480) target = $region36
        $region35: #{tpu_custom_call.1} parent=11 // pred_region
          _
        $region36: #{tpu_custom_call.1} parent=11 // pred_fallthru
          _
        // Predicated region
        $region37: #{tpu_custom_call.1} parent=11 // pred_check
          %p483 = pneg %p212
        $region38: #{tpu_custom_call.1} parent=11 // pred_check_branch
          %485 = sbr.rel (%p483) target = $region40
        $region39: #{tpu_custom_call.1} parent=11 // pred_region
          _
        $region40: #{tpu_custom_call.1} parent=11 // pred_fallthru
          _
        // Predicated region
        $region41: #{tpu_custom_call.1} parent=11 // pred_check
          %p486 = pneg %p233
        $region42: #{tpu_custom_call.1} parent=11 // pred_check_branch
          %488 = sbr.rel (%p486) target = $region44
        $region43: #{tpu_custom_call.1} parent=11 // pred_region
          _
        $region44: #{tpu_custom_call.1} parent=11 // pred_fallthru
          _
        // Predicated region
        $region45: #{tpu_custom_call.1} parent=11 // pred_check
          %p489 = pneg %p254
        $region46: #{tpu_custom_call.1} parent=11 // pred_check_branch
          %491 = sbr.rel (%p489) target = $region48
        $region47: #{tpu_custom_call.1} parent=11 // pred_region
          _
        $region48: #{tpu_custom_call.1} parent=11 // pred_fallthru
          _
        // Predicated region
        $region49: #{tpu_custom_call.1} parent=11 // pred_check
          %p492 = pneg %p275
        $region50: #{tpu_custom_call.1} parent=11 // pred_check_branch
          %494 = sbr.rel (%p492) target = $region52
        $region51: #{tpu_custom_call.1} parent=11 // pred_region
          _
        $region52: #{tpu_custom_call.1} parent=11 // pred_fallthru
          _
        // Predicated region
        $region53: #{tpu_custom_call.1} parent=11 // pred_check
          %p495 = pneg %p296
        $region54: #{tpu_custom_call.1} parent=11 // pred_check_branch
          %497 = sbr.rel (%p495) target = $region56
        $region55: #{tpu_custom_call.1} parent=11 // pred_region
          _
        $region56: #{tpu_custom_call.1} parent=11 // pred_fallthru
          _
        // Predicated region
        $region57: #{tpu_custom_call.1} parent=11 // pred_check
          %p498 = pneg %p317
        $region58: #{tpu_custom_call.1} parent=11 // pred_check_branch
          %500 = sbr.rel (%p498) target = $region60
        $region59: #{tpu_custom_call.1} parent=11 // pred_region
          _
        $region60: #{tpu_custom_call.1} parent=11 // pred_fallthru
          _
        // Predicated region
        $region61: #{tpu_custom_call.1} parent=11 // pred_check
          %p501 = pneg %p338
        $region62: #{tpu_custom_call.1} parent=11 // pred_check_branch
          %503 = sbr.rel (%p501) target = $region64
        $region63: #{tpu_custom_call.1} parent=11 // pred_region
          _
        $region64: #{tpu_custom_call.1} parent=11 // pred_fallthru
          _
        // Predicated region
        $region65: #{tpu_custom_call.1} parent=11 // pred_check
          %p504 = pneg %p359
        $region66: #{tpu_custom_call.1} parent=11 // pred_check_branch
          %506 = sbr.rel (%p504) target = $region68
        $region67: #{tpu_custom_call.1} parent=11 // pred_region
          _
        $region68: #{tpu_custom_call.1} parent=11 // pred_fallthru
          _
        // Predicated region
        $region69: #{tpu_custom_call.1} parent=11 // pred_check
          %p507 = pneg %p380
        $region70: #{tpu_custom_call.1} parent=11 // pred_check_branch
          %509 = sbr.rel (%p507) target = $region72
        $region71: #{tpu_custom_call.1} parent=11 // pred_region
          _
        $region72: #{tpu_custom_call.1} parent=11 // pred_fallthru
          _
        // Predicated region
        $region73: #{tpu_custom_call.1} parent=11 // pred_check
          %p510 = pneg %p401
        $region74: #{tpu_custom_call.1} parent=11 // pred_check_branch
          %512 = sbr.rel (%p510) target = $region76
        $region75: #{tpu_custom_call.1} parent=11 // pred_region
          _
        $region76: #{tpu_custom_call.1} parent=11 // pred_fallthru
          _
        // Predicated region
        $region77: #{tpu_custom_call.1} parent=11 // pred_check
          %p513 = pneg %p422
        $region78: #{tpu_custom_call.1} parent=11 // pred_check_branch
          %515 = sbr.rel (%p513) target = $region80
        $region79: #{tpu_custom_call.1} parent=11 // pred_region
          _
        $region80: #{tpu_custom_call.1} parent=11 // pred_fallthru
          _
      $region12: #{tpu_custom_call.1} parent=5 // pred_fallthru
        _
      %p516 = scmp.lt.s32.totalorder %s27, 2
      // Predicated region
      $region81: #{tpu_custom_call.1} parent=5 // pred_check
        %p517 = pneg %p516
      $region82: #{tpu_custom_call.1} parent=5 // pred_check_branch
        %519 = sbr.rel (%p517) target = $region84
      $region83: #{tpu_custom_call.1} parent=5 // pred_region
        // Predicated region
        $region85: #{tpu_custom_call.1} parent=83 // pred_check
          %p520 = pneg %p59
        $region86: #{tpu_custom_call.1} parent=83 // pred_check_branch
          %522 = sbr.rel (%p520) target = $region88
        $region87: #{tpu_custom_call.1} parent=83 // pred_region
          %p523 = scmp.lt.s32.totalorder %s34, 1
          %s524 = scalar_select %p523, %s34, 1
          %s525 = smul.addr %s524, 8
          %s526 = scalar_lea.vmem %s0, %s525
        $region88: #{tpu_custom_call.1} parent=83 // pred_fallthru
          _
      $region84: #{tpu_custom_call.1} parent=5 // pred_fallthru
        _
      %p527 = scmp.le.s32.totalorder 1, %s27
      %p528 = scmp.lt.s32.totalorder %s27, 3
      %p529 = pnand %p527, %p528
      %p530 = pneg %p529
      // Predicated region
      $region89: #{tpu_custom_call.1} parent=5 // pred_check
        _
      $region90: #{tpu_custom_call.1} parent=5 // pred_check_branch
        %532 = sbr.rel (%p529) target = $region92
      $region91: #{tpu_custom_call.1} parent=5 // pred_region
        %s533 = ssub.s32 %s27, 1
        %p534 = scmp.lt.s32.totalorder %s36, 1
        %s535 = scalar_select %p534, %s36, 1
        %s536 = smul.addr %s535, 8
        %s537 = scalar_lea.vmem %s0, %s536
        %p538 = pneg %p65
        %p539 = pneg %p62
        %p540 = pneg %p86
        %p541 = pneg %p83
        %p542 = pneg %p107
        %p543 = pneg %p104
        %p544 = pneg %p128
        %p545 = pneg %p125
        %p546 = pneg %p149
        %p547 = pneg %p146
        %p548 = pneg %p170
        %p549 = pneg %p167
        %p550 = pneg %p191
        %p551 = pneg %p188
        %p552 = pneg %p212
        %p553 = pneg %p209
        %p554 = pneg %p233
        %p555 = pneg %p230
        %p556 = pneg %p254
        %p557 = pneg %p251
        %p558 = pneg %p275
        %p559 = pneg %p272
        %p560 = pneg %p296
        %p561 = pneg %p293
        %p562 = pneg %p317
        %p563 = pneg %p314
        %p564 = pneg %p338
        %p565 = pneg %p335
        %p566 = pneg %p359
        %p567 = pneg %p356
        %p568 = pneg %p380
        %p569 = pneg %p377
        %p570 = pneg %p401
        %p571 = pneg %p398
        %p572 = pneg %p422
        %p573 = pneg %p419
        %p574 = pneg %p450
        %p575 = pneg %p447
        %s576 = sand.u32 %s437, 1
        %s577 = scalar_lea.sflag [#allocation3], %s576
        %s578 = sand.u32 %s437, 1
        %s579 = smul.addr %s578, 8
        %s580 = scalar_lea.vmem [#allocation2], %s579
        %p581 = scmp.lt.s32.totalorder %s36, 1
        %s582 = scalar_select %p581, %s36, 1
        %s583 = smul.addr %s582, 8
        %s584 = scalar_lea.vmem %s0, %s583
        %s586 = smul.u32 %s37, 8
        %v587 = vld [vmem:[%s584] sm:$0xff]
        %s588 = scalar_lea.vmem %s584, %s586
        %v589 = vld [vmem:[%s588] sm:$0xff]
        %v590 = vld [vmem:[%s1] sm:$0xff]
        %v591 = vadd.f32 %v587, %v590
        %s592 = scalar_lea.vmem %s1, %s586
        %v593 = vld [vmem:[%s592] sm:$0xff]
        %v594 = vadd.f32 %v589, %v593
        %v595 = vpack.c.bf16 %v591, %v591
        %v596 = vpack.c.bf16 %v594, %v594
        %v597 = vld [vmem:[%s2] sm:$0xf]
        %v598 = vld [vmem:[%s2 + $0x4] sm:$0xf]
        %v599 = vld [vmem:[%s2 + $0x8] sm:$0xf]
        %v600 = vld [vmem:[%s2 + $0xc] sm:$0xf]
        %v601 = vld [vmem:[%s3] sm:$0x1]
        %v603 = vlaneseq
        %v604 = vshrl.u32 %v603, 7
        %v605 = vsub.s32 0, %v604
        %v606 = vrot.slane %v601, %v605
        %v612 = vunpack.c.l.b16 %v597
        %v613 = vunpack.c.l.b16 %v598
        %v614 = vunpack.c.l.b16 %v599
        %v615 = vunpack.c.l.b16 %v600
        %v616 = vpack.c.b16 %v613, %v612
        %v617 = vpack.c.b16 %v615, %v614
        %vm620 = vcmask 261120
        %v622 = vsel %vm620, %v596, 0
        %624 = vmatprep.subr.bf16.mxu0 0
        %625 = vmatpush1.bf16.msra.mxu0 %v616
        %626 = vmatprep.subr.bf16.mxu0 0
        %627 = vmatpush1.bf16.msra.mxu0 %v617
        %628 = vmatprep.subr.bf16.mxu0 0
        %629 = vmatpush1.bf16.msra.mxu0 0
        %630 = vmatprep.subr.bf16.mxu0 0
        %631 = vmatpush1.bf16.msra.mxu0 0
        %632 = vmatprep.subr.bf16.mxu0 0
        %633 = vmatpush1.bf16.msra.mxu0 0
        %634 = vmatprep.subr.bf16.mxu0 0
        %635 = vmatpush1.bf16.msra.mxu0 0
        %636 = vmatprep.subr.bf16.mxu0 0
        %637 = vmatpush1.bf16.msra.mxu0 0
        %638 = vmatprep.subr.bf16.mxu0 0
        %639 = vmatpush1.bf16.msra.mxu0 0
        %640 = vmatprep.subr.bf16.mxu0 0
        %641 = vmatpush1.bf16.msra.mxu0 0
        %642 = vmatprep.subr.bf16.mxu0 0
        %643 = vmatpush1.bf16.msra.mxu0 0
        %644 = vmatprep.subr.bf16.mxu0 0
        %645 = vmatpush1.bf16.msra.mxu0 0
        %646 = vmatprep.subr.bf16.mxu0 0
        %647 = vmatpush1.bf16.msra.mxu0 0
        %648 = vmatprep.subr.bf16.mxu0 0
        %649 = vmatpush1.bf16.msra.mxu0 0
        %650 = vmatprep.subr.bf16.mxu0 0
        %651 = vmatpush1.bf16.msra.mxu0 0
        %652 = vmatprep.subr.bf16.mxu0 0
        %653 = vmatpush1.bf16.msra.mxu0 0
        %654 = vmatprep.subr.bf16.mxu0 0
        %655 = vmatpush1.bf16.msra.mxu0 0
        %656 = vmatprep.mubr.bf16.mxu0 0
        %657 = vmatmul.mubr.bf16.gmra.mrb[0].mxu0 %v622
        %v658 = vpop.f32.mrb[0].mxu0
        %v659 = vadd.f32 %v606, %v658
        %v660 = vpop.f32.mrb[0].mxu0
        %v661 = vpop.f32.mrb[0].mxu0
        %v662 = vpop.f32.mrb[0].mxu0
        %663 = vdwg.mxu0
        %v664 = vmul.f32 %v659, 0.35355338
        %v665 = vld [vmem:[%s4] sm:$0xf]
        %v666 = vld [vmem:[%s4 + $0x4] sm:$0xf]
        %v667 = vld [vmem:[%s4 + $0x8] sm:$0xf]
        %v668 = vld [vmem:[%s4 + $0xc] sm:$0xf]
        %v669 = vld [vmem:[%s5] sm:$0x1]
        %v671 = vlaneseq
        %v672 = vshrl.u32 %v671, 7
        %v673 = vsub.s32 0, %v672
        %v674 = vrot.slane %v669, %v673
        %v680 = vunpack.c.l.b16 %v665
        %v681 = vunpack.c.l.b16 %v666
        %v682 = vunpack.c.l.b16 %v667
        %v683 = vunpack.c.l.b16 %v668
        %v684 = vpack.c.b16 %v681, %v680
        %v685 = vpack.c.b16 %v683, %v682
        %v689 = vsel %vm620, %v595, 0
        %691 = vmatprep.subr.bf16.mxu0 0
        %692 = vmatpush1.bf16.msra.mxu0 %v684
        %693 = vmatprep.subr.bf16.mxu0 0
        %694 = vmatpush1.bf16.msra.mxu0 %v685
        %695 = vmatprep.subr.bf16.mxu0 0
        %696 = vmatpush1.bf16.msra.mxu0 0
        %697 = vmatprep.subr.bf16.mxu0 0
        %698 = vmatpush1.bf16.msra.mxu0 0
        %699 = vmatprep.subr.bf16.mxu0 0
        %700 = vmatpush1.bf16.msra.mxu0 0
        %701 = vmatprep.subr.bf16.mxu0 0
        %702 = vmatpush1.bf16.msra.mxu0 0
        %703 = vmatprep.subr.bf16.mxu0 0
        %704 = vmatpush1.bf16.msra.mxu0 0
        %705 = vmatprep.subr.bf16.mxu0 0
        %706 = vmatpush1.bf16.msra.mxu0 0
        %707 = vmatprep.subr.bf16.mxu0 0
        %708 = vmatpush1.bf16.msra.mxu0 0
        %709 = vmatprep.subr.bf16.mxu0 0
        %710 = vmatpush1.bf16.msra.mxu0 0
        %711 = vmatprep.subr.bf16.mxu0 0
        %712 = vmatpush1.bf16.msra.mxu0 0
        %713 = vmatprep.subr.bf16.mxu0 0
        %714 = vmatpush1.bf16.msra.mxu0 0
        %715 = vmatprep.subr.bf16.mxu0 0
        %716 = vmatpush1.bf16.msra.mxu0 0
        %717 = vmatprep.subr.bf16.mxu0 0
        %718 = vmatpush1.bf16.msra.mxu0 0
        %719 = vmatprep.subr.bf16.mxu0 0
        %720 = vmatpush1.bf16.msra.mxu0 0
        %721 = vmatprep.subr.bf16.mxu0 0
        %722 = vmatpush1.bf16.msra.mxu0 0
        %723 = vmatprep.mubr.bf16.mxu0 0
        %724 = vmatmul.mubr.bf16.gmra.mrb[0].mxu0 %v689
        %v725 = vpop.f32.mrb[0].mxu0
        %v726 = vadd.f32 %v674, %v725
        %v727 = vpop.f32.mrb[0].mxu0
        %v728 = vpop.f32.mrb[0].mxu0
        %v729 = vpop.f32.mrb[0].mxu0
        %730 = vdwg.mxu0
        %v731 = vld [vmem:[%s6] sm:$0xf]
        %v732 = vld [vmem:[%s6 + $0x4] sm:$0xf]
        %v733 = vld [vmem:[%s6 + $0x8] sm:$0xf]
        %v734 = vld [vmem:[%s6 + $0xc] sm:$0xf]
        %v735 = vld [vmem:[%s7] sm:$0x1]
        %v737 = vlaneseq
        %v738 = vshrl.u32 %v737, 7
        %v739 = vsub.s32 0, %v738
        %v740 = vrot.slane %v735, %v739
        %v746 = vunpack.c.l.b16 %v731
        %v747 = vunpack.c.l.b16 %v732
        %v748 = vunpack.c.l.b16 %v733
        %v749 = vunpack.c.l.b16 %v734
        %v750 = vpack.c.b16 %v747, %v746
        %v751 = vpack.c.b16 %v749, %v748
        %754 = vmatprep.subr.bf16.mxu0 0
        %755 = vmatpush1.bf16.msra.mxu0 %v750
        %756 = vmatprep.subr.bf16.mxu0 0
        %757 = vmatpush1.bf16.msra.mxu0 %v751
        %758 = vmatprep.subr.bf16.mxu0 0
        %759 = vmatpush1.bf16.msra.mxu0 0
        %760 = vmatprep.subr.bf16.mxu0 0
        %761 = vmatpush1.bf16.msra.mxu0 0
        %762 = vmatprep.subr.bf16.mxu0 0
        %763 = vmatpush1.bf16.msra.mxu0 0
        %764 = vmatprep.subr.bf16.mxu0 0
        %765 = vmatpush1.bf16.msra.mxu0 0
        %766 = vmatprep.subr.bf16.mxu0 0
        %767 = vmatpush1.bf16.msra.mxu0 0
        %768 = vmatprep.subr.bf16.mxu0 0
        %769 = vmatpush1.bf16.msra.mxu0 0
        %770 = vmatprep.subr.bf16.mxu0 0
        %771 = vmatpush1.bf16.msra.mxu0 0
        %772 = vmatprep.subr.bf16.mxu0 0
        %773 = vmatpush1.bf16.msra.mxu0 0
        %774 = vmatprep.subr.bf16.mxu0 0
        %775 = vmatpush1.bf16.msra.mxu0 0
        %776 = vmatprep.subr.bf16.mxu0 0
        %777 = vmatpush1.bf16.msra.mxu0 0
        %778 = vmatprep.subr.bf16.mxu0 0
        %779 = vmatpush1.bf16.msra.mxu0 0
        %780 = vmatprep.subr.bf16.mxu0 0
        %781 = vmatpush1.bf16.msra.mxu0 0
        %782 = vmatprep.subr.bf16.mxu0 0
        %783 = vmatpush1.bf16.msra.mxu0 0
        %784 = vmatprep.subr.bf16.mxu0 0
        %785 = vmatpush1.bf16.msra.mxu0 0
        %786 = vmatprep.mubr.bf16.mxu0 0
        %787 = vmatmul.mubr.bf16.gmra.mrb[0].mxu0 %v689
        %v788 = vpop.f32.mrb[0].mxu0
        %v789 = vadd.f32 %v740, %v788
        %v790 = vpop.f32.mrb[0].mxu0
        %v791 = vpop.f32.mrb[0].mxu0
        %v792 = vpop.f32.mrb[0].mxu0
        %793 = vdwg.mxu0
        %v794 = vpack.c.bf16 %v664, %v664
        %v795 = vpack.c.bf16 %v726, %v726
        %vm796 = vcmask 64512
        %v798 = vsel %vm796, %v794, 0
        %v801 = vsel %vm796, %v795, 0
        %803 = vmatprep.subr.bf16.mxu0 0
        %804 = vmatpush1.bf16.xpose.msra.mxu0 %v801
        %805 = vmatprep.subr.bf16.mxu0 0
        %806 = vmatpush1.bf16.xpose.msra.mxu0 0
        %807 = vmatprep.subr.bf16.mxu0 0
        %808 = vmatpush1.bf16.xpose.msra.mxu0 0
        %809 = vmatprep.subr.bf16.mxu0 0
        %810 = vmatpush1.bf16.xpose.msra.mxu0 0
        %811 = vmatprep.subr.bf16.mxu0 0
        %812 = vmatpush1.bf16.xpose.msra.mxu0 0
        %813 = vmatprep.subr.bf16.mxu0 0
        %814 = vmatpush1.bf16.xpose.msra.mxu0 0
        %815 = vmatprep.subr.bf16.mxu0 0
        %816 = vmatpush1.bf16.xpose.msra.mxu0 0
        %817 = vmatprep.subr.bf16.mxu0 0
        %818 = vmatpush1.bf16.xpose.msra.mxu0 0
        %819 = vmatprep.subr.bf16.mxu0 0
        %820 = vmatpush1.bf16.xpose.msra.mxu0 0
        %821 = vmatprep.subr.bf16.mxu0 0
        %822 = vmatpush1.bf16.xpose.msra.mxu0 0
        %823 = vmatprep.subr.bf16.mxu0 0
        %824 = vmatpush1.bf16.xpose.msra.mxu0 0
        %825 = vmatprep.subr.bf16.mxu0 0
        %826 = vmatpush1.bf16.xpose.msra.mxu0 0
        %827 = vmatprep.subr.bf16.mxu0 0
        %828 = vmatpush1.bf16.xpose.msra.mxu0 0
        %829 = vmatprep.subr.bf16.mxu0 0
        %830 = vmatpush1.bf16.xpose.msra.mxu0 0
        %831 = vmatprep.subr.bf16.mxu0 0
        %832 = vmatpush1.bf16.xpose.msra.mxu0 0
        %833 = vmatprep.subr.bf16.mxu0 0
        %834 = vmatpush1.bf16.xpose.msra.mxu0 0
        %835 = vmatprep.mubr.bf16.mxu0 0
        %836 = vmatmul.mubr.bf16.gmra.mrb[0].mxu0 %v798
        %v837 = vpop.f32.mrb[0].mxu0
        %v838 = vadd.f32 0.0, %v837
        %v839 = vpop.f32.mrb[0].mxu0
        %v840 = vpop.f32.mrb[0].mxu0
        %v841 = vpop.f32.mrb[0].mxu0
        %842 = vdwg.mxu0
        %v843 = vsel %vm796, %v838, -inf
        %844 = vmax.xlane.f32.xlu0 %v843
        %v845 = vpop.xlane.xlu0 %844
        %v846 = vsub.f32 %v838, %v845
        %v847 = vmul.f32 %v846, 1.442695
        %v848 = vpow.pop %v847
        %v849 = vsel %vm796, %v848, 0.0
        %850 = vadd.xlane.f32.xlu0 %v849
        %v851 = vpop.xlane.xlu0 %850
        %v852 = vrcp.pop %v851
        %v853 = vmul.f32 %v848, %v852
        %v854 = vpack.c.bf16 %v853, %v853
        %v855 = vpack.c.bf16 %v789, %v789
        %v857 = vsel %vm796, %v854, 0
        %vm859 = vcmask 1043456
        %v861 = vsel %vm859, %v855, 0
        %863 = vmatprep.subr.bf16.mxu0 0
        %864 = vmatpush1.bf16.msra.mxu0 %v861
        %865 = vmatprep.subr.bf16.mxu0 0
        %866 = vmatpush1.bf16.msra.mxu0 0
        %867 = vmatprep.subr.bf16.mxu0 0
        %868 = vmatpush1.bf16.msra.mxu0 0
        %869 = vmatprep.subr.bf16.mxu0 0
        %870 = vmatpush1.bf16.msra.mxu0 0
        %871 = vmatprep.subr.bf16.mxu0 0
        %872 = vmatpush1.bf16.msra.mxu0 0
        %873 = vmatprep.subr.bf16.mxu0 0
        %874 = vmatpush1.bf16.msra.mxu0 0
        %875 = vmatprep.subr.bf16.mxu0 0
        %876 = vmatpush1.bf16.msra.mxu0 0
        %877 = vmatprep.subr.bf16.mxu0 0
        %878 = vmatpush1.bf16.msra.mxu0 0
        %879 = vmatprep.subr.bf16.mxu0 0
        %880 = vmatpush1.bf16.msra.mxu0 0
        %881 = vmatprep.subr.bf16.mxu0 0
        %882 = vmatpush1.bf16.msra.mxu0 0
        %883 = vmatprep.subr.bf16.mxu0 0
        %884 = vmatpush1.bf16.msra.mxu0 0
        %885 = vmatprep.subr.bf16.mxu0 0
        %886 = vmatpush1.bf16.msra.mxu0 0
        %887 = vmatprep.subr.bf16.mxu0 0
        %888 = vmatpush1.bf16.msra.mxu0 0
        %889 = vmatprep.subr.bf16.mxu0 0
        %890 = vmatpush1.bf16.msra.mxu0 0
        %891 = vmatprep.subr.bf16.mxu0 0
        %892 = vmatpush1.bf16.msra.mxu0 0
        %893 = vmatprep.subr.bf16.mxu0 0
        %894 = vmatpush1.bf16.msra.mxu0 0
        %895 = vmatprep.mubr.bf16.mxu0 0
        %896 = vmatmul.mubr.bf16.gmra.mrb[0].mxu0 %v857
        %v897 = vpop.f32.mrb[0].mxu0
        %v898 = vadd.f32 0.0, %v897
        %v899 = vpop.f32.mrb[0].mxu0
        %v900 = vpop.f32.mrb[0].mxu0
        %v901 = vpop.f32.mrb[0].mxu0
        %902 = vdwg.mxu0
        %v903 = vpack.c.bf16 %v898, %v898
        %v904 = vld [vmem:[%s8] sm:$0xf]
        %s905 = scalar_lea.vmem %s2, 16
        %v906 = vld [vmem:[%s905] sm:$0xf]
        %v907 = vld [vmem:[%s905 + $0x4] sm:$0xf]
        %v908 = vld [vmem:[%s905 + $0x8] sm:$0xf]
        %v909 = vld [vmem:[%s905 + $0xc] sm:$0xf]
        %s910 = scalar_lea.vmem %s3, 1
        %v911 = vld [vmem:[%s910] sm:$0x1]
        %v913 = vlaneseq
        %v914 = vshrl.u32 %v913, 7
        %v915 = vsub.s32 0, %v914
        %v916 = vrot.slane %v911, %v915
        %v922 = vunpack.c.l.b16 %v906
        %v923 = vunpack.c.l.b16 %v907
        %v924 = vunpack.c.l.b16 %v908
        %v925 = vunpack.c.l.b16 %v909
        %v926 = vpack.c.b16 %v923, %v922
        %v927 = vpack.c.b16 %v925, %v924
        %930 = vmatprep.subr.bf16.mxu0 0
        %931 = vmatpush1.bf16.msra.mxu0 %v926
        %932 = vmatprep.subr.bf16.mxu0 0
        %933 = vmatpush1.bf16.msra.mxu0 %v927
        %934 = vmatprep.subr.bf16.mxu0 0
        %935 = vmatpush1.bf16.msra.mxu0 0
        %936 = vmatprep.subr.bf16.mxu0 0
        %937 = vmatpush1.bf16.msra.mxu0 0
        %938 = vmatprep.subr.bf16.mxu0 0
        %939 = vmatpush1.bf16.msra.mxu0 0
        %940 = vmatprep.subr.bf16.mxu0 0
        %941 = vmatpush1.bf16.msra.mxu0 0
        %942 = vmatprep.subr.bf16.mxu0 0
        %943 = vmatpush1.bf16.msra.mxu0 0
        %944 = vmatprep.subr.bf16.mxu0 0
        %945 = vmatpush1.bf16.msra.mxu0 0
        %946 = vmatprep.subr.bf16.mxu0 0
        %947 = vmatpush1.bf16.msra.mxu0 0
        %948 = vmatprep.subr.bf16.mxu0 0
        %949 = vmatpush1.bf16.msra.mxu0 0
        %950 = vmatprep.subr.bf16.mxu0 0
        %951 = vmatpush1.bf16.msra.mxu0 0
        %952 = vmatprep.subr.bf16.mxu0 0
        %953 = vmatpush1.bf16.msra.mxu0 0
        %954 = vmatprep.subr.bf16.mxu0 0
        %955 = vmatpush1.bf16.msra.mxu0 0
        %956 = vmatprep.subr.bf16.mxu0 0
        %957 = vmatpush1.bf16.msra.mxu0 0
        %958 = vmatprep.subr.bf16.mxu0 0
        %959 = vmatpush1.bf16.msra.mxu0 0
        %960 = vmatprep.subr.bf16.mxu0 0
        %961 = vmatpush1.bf16.msra.mxu0 0
        %962 = vmatprep.mubr.bf16.mxu0 0
        %963 = vmatmul.mubr.bf16.gmra.mrb[0].mxu0 %v622
        %v964 = vpop.f32.mrb[0].mxu0
        %v965 = vadd.f32 %v916, %v964
        %v966 = vpop.f32.mrb[0].mxu0
        %v967 = vpop.f32.mrb[0].mxu0
        %v968 = vpop.f32.mrb[0].mxu0
        %969 = vdwg.mxu0
        %v970 = vmul.f32 %v965, 0.35355338
        %s971 = scalar_lea.vmem %s4, 16
        %v972 = vld [vmem:[%s971] sm:$0xf]
        %v973 = vld [vmem:[%s971 + $0x4] sm:$0xf]
        %v974 = vld [vmem:[%s971 + $0x8] sm:$0xf]
        %v975 = vld [vmem:[%s971 + $0xc] sm:$0xf]
        %s976 = scalar_lea.vmem %s5, 1
        %v977 = vld [vmem:[%s976] sm:$0x1]
        %v979 = vlaneseq
        %v980 = vshrl.u32 %v979, 7
        %v981 = vsub.s32 0, %v980
        %v982 = vrot.slane %v977, %v981
        %v988 = vunpack.c.l.b16 %v972
        %v989 = vunpack.c.l.b16 %v973
        %v990 = vunpack.c.l.b16 %v974
        %v991 = vunpack.c.l.b16 %v975
        %v992 = vpack.c.b16 %v989, %v988
        %v993 = vpack.c.b16 %v991, %v990
        %996 = vmatprep.subr.bf16.mxu0 0
        %997 = vmatpush1.bf16.msra.mxu0 %v992
        %998 = vmatprep.subr.bf16.mxu0 0
        %999 = vmatpush1.bf16.msra.mxu0 %v993
        %1000 = vmatprep.subr.bf16.mxu0 0
        %1001 = vmatpush1.bf16.msra.mxu0 0
        %1002 = vmatprep.subr.bf16.mxu0 0
        %1003 = vmatpush1.bf16.msra.mxu0 0
        %1004 = vmatprep.subr.bf16.mxu0 0
        %1005 = vmatpush1.bf16.msra.mxu0 0
        %1006 = vmatprep.subr.bf16.mxu0 0
        %1007 = vmatpush1.bf16.msra.mxu0 0
        %1008 = vmatprep.subr.bf16.mxu0 0
        %1009 = vmatpush1.bf16.msra.mxu0 0
        %1010 = vmatprep.subr.bf16.mxu0 0
        %1011 = vmatpush1.bf16.msra.mxu0 0
        %1012 = vmatprep.subr.bf16.mxu0 0
        %1013 = vmatpush1.bf16.msra.mxu0 0
        %1014 = vmatprep.subr.bf16.mxu0 0
        %1015 = vmatpush1.bf16.msra.mxu0 0
        %1016 = vmatprep.subr.bf16.mxu0 0
        %1017 = vmatpush1.bf16.msra.mxu0 0
        %1018 = vmatprep.subr.bf16.mxu0 0
        %1019 = vmatpush1.bf16.msra.mxu0 0
        %1020 = vmatprep.subr.bf16.mxu0 0
        %1021 = vmatpush1.bf16.msra.mxu0 0
        %1022 = vmatprep.subr.bf16.mxu0 0
        %1023 = vmatpush1.bf16.msra.mxu0 0
        %1024 = vmatprep.subr.bf16.mxu0 0
        %1025 = vmatpush1.bf16.msra.mxu0 0
        %1026 = vmatprep.subr.bf16.mxu0 0
        %1027 = vmatpush1.bf16.msra.mxu0 0
        %1028 = vmatprep.mubr.bf16.mxu0 0
        %1029 = vmatmul.mubr.bf16.gmra.mrb[0].mxu0 %v689
        %v1030 = vpop.f32.mrb[0].mxu0
        %v1031 = vadd.f32 %v982, %v1030
        %v1032 = vpop.f32.mrb[0].mxu0
        %v1033 = vpop.f32.mrb[0].mxu0
        %v1034 = vpop.f32.mrb[0].mxu0
        %1035 = vdwg.mxu0
        %s1036 = scalar_lea.vmem %s6, 16
        %v1037 = vld [vmem:[%s1036] sm:$0xf]
        %v1038 = vld [vmem:[%s1036 + $0x4] sm:$0xf]
        %v1039 = vld [vmem:[%s1036 + $0x8] sm:$0xf]
        %v1040 = vld [vmem:[%s1036 + $0xc] sm:$0xf]
        %s1041 = scalar_lea.vmem %s7, 1
        %v1042 = vld [vmem:[%s1041] sm:$0x1]
        %v1044 = vlaneseq
        %v1045 = vshrl.u32 %v1044, 7
        %v1046 = vsub.s32 0, %v1045
        %v1047 = vrot.slane %v1042, %v1046
        %v1053 = vunpack.c.l.b16 %v1037
        %v1054 = vunpack.c.l.b16 %v1038
        %v1055 = vunpack.c.l.b16 %v1039
        %v1056 = vunpack.c.l.b16 %v1040
        %v1057 = vpack.c.b16 %v1054, %v1053
        %v1058 = vpack.c.b16 %v1056, %v1055
        %1061 = vmatprep.subr.bf16.mxu0 0
        %1062 = vmatpush1.bf16.msra.mxu0 %v1057
        %1063 = vmatprep.subr.bf16.mxu0 0
        %1064 = vmatpush1.bf16.msra.mxu0 %v1058
        %1065 = vmatprep.subr.bf16.mxu0 0
        %1066 = vmatpush1.bf16.msra.mxu0 0
        %1067 = vmatprep.subr.bf16.mxu0 0
        %1068 = vmatpush1.bf16.msra.mxu0 0
        %1069 = vmatprep.subr.bf16.mxu0 0
        %1070 = vmatpush1.bf16.msra.mxu0 0
        %1071 = vmatprep.subr.bf16.mxu0 0
        %1072 = vmatpush1.bf16.msra.mxu0 0
        %1073 = vmatprep.subr.bf16.mxu0 0
        %1074 = vmatpush1.bf16.msra.mxu0 0
        %1075 = vmatprep.subr.bf16.mxu0 0
        %1076 = vmatpush1.bf16.msra.mxu0 0
        %1077 = vmatprep.subr.bf16.mxu0 0
        %1078 = vmatpush1.bf16.msra.mxu0 0
        %1079 = vmatprep.subr.bf16.mxu0 0
        %1080 = vmatpush1.bf16.msra.mxu0 0
        %1081 = vmatprep.subr.bf16.mxu0 0
        %1082 = vmatpush1.bf16.msra.mxu0 0
        %1083 = vmatprep.subr.bf16.mxu0 0
        %1084 = vmatpush1.bf16.msra.mxu0 0
        %1085 = vmatprep.subr.bf16.mxu0 0
        %1086 = vmatpush1.bf16.msra.mxu0 0
        %1087 = vmatprep.subr.bf16.mxu0 0
        %1088 = vmatpush1.bf16.msra.mxu0 0
        %1089 = vmatprep.subr.bf16.mxu0 0
        %1090 = vmatpush1.bf16.msra.mxu0 0
        %1091 = vmatprep.subr.bf16.mxu0 0
        %1092 = vmatpush1.bf16.msra.mxu0 0
        %1093 = vmatprep.mubr.bf16.mxu0 0
        %1094 = vmatmul.mubr.bf16.gmra.mrb[0].mxu0 %v689
        %v1095 = vpop.f32.mrb[0].mxu0
        %v1096 = vadd.f32 %v1047, %v1095
        %v1097 = vpop.f32.mrb[0].mxu0
        %v1098 = vpop.f32.mrb[0].mxu0
        %v1099 = vpop.f32.mrb[0].mxu0
        %1100 = vdwg.mxu0
        %v1101 = vpack.c.bf16 %v970, %v970
        %v1102 = vpack.c.bf16 %v1031, %v1031
        %v1104 = vsel %vm796, %v1101, 0
        %v1107 = vsel %vm796, %v1102, 0
        %1109 = vmatprep.subr.bf16.mxu0 0
        %1110 = vmatpush1.bf16.xpose.msra.mxu0 %v1107
        %1111 = vmatprep.subr.bf16.mxu0 0
        %1112 = vmatpush1.bf16.xpose.msra.mxu0 0
        %1113 = vmatprep.subr.bf16.mxu0 0
        %1114 = vmatpush1.bf16.xpose.msra.mxu0 0
        %1115 = vmatprep.subr.bf16.mxu0 0
        %1116 = vmatpush1.bf16.xpose.msra.mxu0 0
        %1117 = vmatprep.subr.bf16.mxu0 0
        %1118 = vmatpush1.bf16.xpose.msra.mxu0 0
        %1119 = vmatprep.subr.bf16.mxu0 0
        %1120 = vmatpush1.bf16.xpose.msra.mxu0 0
        %1121 = vmatprep.subr.bf16.mxu0 0
        %1122 = vmatpush1.bf16.xpose.msra.mxu0 0
        %1123 = vmatprep.subr.bf16.mxu0 0
        %1124 = vmatpush1.bf16.xpose.msra.mxu0 0
        %1125 = vmatprep.subr.bf16.mxu0 0
        %1126 = vmatpush1.bf16.xpose.msra.mxu0 0
        %1127 = vmatprep.subr.bf16.mxu0 0
        %1128 = vmatpush1.bf16.xpose.msra.mxu0 0
        %1129 = vmatprep.subr.bf16.mxu0 0
        %1130 = vmatpush1.bf16.xpose.msra.mxu0 0
        %1131 = vmatprep.subr.bf16.mxu0 0
        %1132 = vmatpush1.bf16.xpose.msra.mxu0 0
        %1133 = vmatprep.subr.bf16.mxu0 0
        %1134 = vmatpush1.bf16.xpose.msra.mxu0 0
        %1135 = vmatprep.subr.bf16.mxu0 0
        %1136 = vmatpush1.bf16.xpose.msra.mxu0 0
        %1137 = vmatprep.subr.bf16.mxu0 0
        %1138 = vmatpush1.bf16.xpose.msra.mxu0 0
        %1139 = vmatprep.subr.bf16.mxu0 0
        %1140 = vmatpush1.bf16.xpose.msra.mxu0 0
        %1141 = vmatprep.mubr.bf16.mxu0 0
        %1142 = vmatmul.mubr.bf16.gmra.mrb[0].mxu0 %v1104
        %v1143 = vpop.f32.mrb[0].mxu0
        %v1144 = vadd.f32 0.0, %v1143
        %v1145 = vpop.f32.mrb[0].mxu0
        %v1146 = vpop.f32.mrb[0].mxu0
        %v1147 = vpop.f32.mrb[0].mxu0
        %1148 = vdwg.mxu0
        %v1149 = vsel %vm796, %v1144, -inf
        %1150 = vmax.xlane.f32.xlu0 %v1149
        %v1151 = vpop.xlane.xlu0 %1150
        %v1152 = vsub.f32 %v1144, %v1151
        %v1153 = vmul.f32 %v1152, 1.442695
        %v1154 = vpow.pop %v1153
        %v1155 = vsel %vm796, %v1154, 0.0
        %1156 = vadd.xlane.f32.xlu0 %v1155
        %v1157 = vpop.xlane.xlu0 %1156
        %v1158 = vrcp.pop %v1157
        %v1159 = vmul.f32 %v1154, %v1158
        %v1160 = vpack.c.bf16 %v1159, %v1159
        %v1161 = vpack.c.bf16 %v1096, %v1096
        %v1163 = vsel %vm796, %v1160, 0
        %v1166 = vsel %vm859, %v1161, 0
        %1168 = vmatprep.subr.bf16.mxu0 0
        %1169 = vmatpush1.bf16.msra.mxu0 %v1166
        %1170 = vmatprep.subr.bf16.mxu0 0
        %1171 = vmatpush1.bf16.msra.mxu0 0
        %1172 = vmatprep.subr.bf16.mxu0 0
        %1173 = vmatpush1.bf16.msra.mxu0 0
        %1174 = vmatprep.subr.bf16.mxu0 0
        %1175 = vmatpush1.bf16.msra.mxu0 0
        %1176 = vmatprep.subr.bf16.mxu0 0
        %1177 = vmatpush1.bf16.msra.mxu0 0
        %1178 = vmatprep.subr.bf16.mxu0 0
        %1179 = vmatpush1.bf16.msra.mxu0 0
        %1180 = vmatprep.subr.bf16.mxu0 0
        %1181 = vmatpush1.bf16.msra.mxu0 0
        %1182 = vmatprep.subr.bf16.mxu0 0
        %1183 = vmatpush1.bf16.msra.mxu0 0
        %1184 = vmatprep.subr.bf16.mxu0 0
        %1185 = vmatpush1.bf16.msra.mxu0 0
        %1186 = vmatprep.subr.bf16.mxu0 0
        %1187 = vmatpush1.bf16.msra.mxu0 0
        %1188 = vmatprep.subr.bf16.mxu0 0
        %1189 = vmatpush1.bf16.msra.mxu0 0
        %1190 = vmatprep.subr.bf16.mxu0 0
        %1191 = vmatpush1.bf16.msra.mxu0 0
        %1192 = vmatprep.subr.bf16.mxu0 0
        %1193 = vmatpush1.bf16.msra.mxu0 0
        %1194 = vmatprep.subr.bf16.mxu0 0
        %1195 = vmatpush1.bf16.msra.mxu0 0
        %1196 = vmatprep.subr.bf16.mxu0 0
        %1197 = vmatpush1.bf16.msra.mxu0 0
        %1198 = vmatprep.subr.bf16.mxu0 0
        %1199 = vmatpush1.bf16.msra.mxu0 0
        %1200 = vmatprep.mubr.bf16.mxu0 0
        %1201 = vmatmul.mubr.bf16.gmra.mrb[0].mxu0 %v1163
        %v1202 = vpop.f32.mrb[0].mxu0
        %v1203 = vadd.f32 0.0, %v1202
        %v1204 = vpop.f32.mrb[0].mxu0
        %v1205 = vpop.f32.mrb[0].mxu0
        %v1206 = vpop.f32.mrb[0].mxu0
        %1207 = vdwg.mxu0
        %v1208 = vpack.c.bf16 %v1203, %v1203
        %s1209 = scalar_lea.vmem %s8, 4
        %v1210 = vld [vmem:[%s1209] sm:$0xf]
        %v1212 = vsel %vm796, %v1208, 0
        %v1215 = vsel %vm859, %v1210, 0
        %1217 = vmatprep.subr.bf16.mxu0 0
        %1218 = vmatpush1.bf16.msra.mxu0 %v1215
        %1219 = vmatprep.subr.bf16.mxu0 0
        %1220 = vmatpush1.bf16.msra.mxu0 0
        %1221 = vmatprep.subr.bf16.mxu0 0
        %1222 = vmatpush1.bf16.msra.mxu0 0
        %1223 = vmatprep.subr.bf16.mxu0 0
        %1224 = vmatpush1.bf16.msra.mxu0 0
        %1225 = vmatprep.subr.bf16.mxu0 0
        %1226 = vmatpush1.bf16.msra.mxu0 0
        %1227 = vmatprep.subr.bf16.mxu0 0
        %1228 = vmatpush1.bf16.msra.mxu0 0
        %1229 = vmatprep.subr.bf16.mxu0 0
        %1230 = vmatpush1.bf16.msra.mxu0 0
        %1231 = vmatprep.subr.bf16.mxu0 0
        %1232 = vmatpush1.bf16.msra.mxu0 0
        %1233 = vmatprep.subr.bf16.mxu0 0
        %1234 = vmatpush1.bf16.msra.mxu0 0
        %1235 = vmatprep.subr.bf16.mxu0 0
        %1236 = vmatpush1.bf16.msra.mxu0 0
        %1237 = vmatprep.subr.bf16.mxu0 0
        %1238 = vmatpush1.bf16.msra.mxu0 0
        %1239 = vmatprep.subr.bf16.mxu0 0
        %1240 = vmatpush1.bf16.msra.mxu0 0
        %1241 = vmatprep.subr.bf16.mxu0 0
        %1242 = vmatpush1.bf16.msra.mxu0 0
        %1243 = vmatprep.subr.bf16.mxu0 0
        %1244 = vmatpush1.bf16.msra.mxu0 0
        %1245 = vmatprep.subr.bf16.mxu0 0
        %1246 = vmatpush1.bf16.msra.mxu0 0
        %1247 = vmatprep.subr.bf16.mxu0 0
        %1248 = vmatpush1.bf16.msra.mxu0 0
        %1249 = vmatprep.mubr.bf16.mxu0 0
        %1250 = vmatmul.mubr.bf16.gmra.mrb[0].mxu0 %v1212
        %v1251 = vpop.f32.mrb[0].mxu0
        %v1252 = vadd.f32 0.0, %v1251
        %v1253 = vpop.f32.mrb[0].mxu0
        %v1254 = vpop.f32.mrb[0].mxu0
        %v1255 = vpop.f32.mrb[0].mxu0
        %1256 = vdwg.mxu0
        %v1258 = vsel %vm796, %v903, 0
        %v1261 = vsel %vm859, %v904, 0
        %1263 = vmatprep.subr.bf16.mxu0 0
        %1264 = vmatpush1.bf16.msra.mxu0 %v1261
        %1265 = vmatprep.subr.bf16.mxu0 0
        %1266 = vmatpush1.bf16.msra.mxu0 0
        %1267 = vmatprep.subr.bf16.mxu0 0
        %1268 = vmatpush1.bf16.msra.mxu0 0
        %1269 = vmatprep.subr.bf16.mxu0 0
        %1270 = vmatpush1.bf16.msra.mxu0 0
        %1271 = vmatprep.subr.bf16.mxu0 0
        %1272 = vmatpush1.bf16.msra.mxu0 0
        %1273 = vmatprep.subr.bf16.mxu0 0
        %1274 = vmatpush1.bf16.msra.mxu0 0
        %1275 = vmatprep.subr.bf16.mxu0 0
        %1276 = vmatpush1.bf16.msra.mxu0 0
        %1277 = vmatprep.subr.bf16.mxu0 0
        %1278 = vmatpush1.bf16.msra.mxu0 0
        %1279 = vmatprep.subr.bf16.mxu0 0
        %1280 = vmatpush1.bf16.msra.mxu0 0
        %1281 = vmatprep.subr.bf16.mxu0 0
        %1282 = vmatpush1.bf16.msra.mxu0 0
        %1283 = vmatprep.subr.bf16.mxu0 0
        %1284 = vmatpush1.bf16.msra.mxu0 0
        %1285 = vmatprep.subr.bf16.mxu0 0
        %1286 = vmatpush1.bf16.msra.mxu0 0
        %1287 = vmatprep.subr.bf16.mxu0 0
        %1288 = vmatpush1.bf16.msra.mxu0 0
        %1289 = vmatprep.subr.bf16.mxu0 0
        %1290 = vmatpush1.bf16.msra.mxu0 0
        %1291 = vmatprep.subr.bf16.mxu0 0
        %1292 = vmatpush1.bf16.msra.mxu0 0
        %1293 = vmatprep.subr.bf16.mxu0 0
        %1294 = vmatpush1.bf16.msra.mxu0 0
        %1295 = vmatprep.mubr.bf16.mxu0 0
        %1296 = vmatmul.mubr.bf16.gmra.mrb[0].mxu0 %v1258
        %v1297 = vpop.f32.mrb[0].mxu0
        %v1298 = vadd.f32 %v1252, %v1297
        %v1299 = vpop.f32.mrb[0].mxu0
        %v1300 = vpop.f32.mrb[0].mxu0
        %v1301 = vpop.f32.mrb[0].mxu0
        %1302 = vdwg.mxu0
        %s1303 = scalar_lea.vmem %s2, 32
        %v1304 = vld [vmem:[%s1303] sm:$0xf]
        %v1305 = vld [vmem:[%s1303 + $0x4] sm:$0xf]
        %v1306 = vld [vmem:[%s1303 + $0x8] sm:$0xf]
        %v1307 = vld [vmem:[%s1303 + $0xc] sm:$0xf]
        %s1308 = scalar_lea.vmem %s3, 2
        %v1309 = vld [vmem:[%s1308] sm:$0x1]
        %v1311 = vlaneseq
        %v1312 = vshrl.u32 %v1311, 7
        %v1313 = vsub.s32 0, %v1312
        %v1314 = vrot.slane %v1309, %v1313
        %v1320 = vunpack.c.l.b16 %v1304
        %v1321 = vunpack.c.l.b16 %v1305
        %v1322 = vunpack.c.l.b16 %v1306
        %v1323 = vunpack.c.l.b16 %v1307
        %v1324 = vpack.c.b16 %v1321, %v1320
        %v1325 = vpack.c.b16 %v1323, %v1322
        %1328 = vmatprep.subr.bf16.mxu0 0
        %1329 = vmatpush1.bf16.msra.mxu0 %v1324
        %1330 = vmatprep.subr.bf16.mxu0 0
        %1331 = vmatpush1.bf16.msra.mxu0 %v1325
        %1332 = vmatprep.subr.bf16.mxu0 0
        %1333 = vmatpush1.bf16.msra.mxu0 0
        %1334 = vmatprep.subr.bf16.mxu0 0
        %1335 = vmatpush1.bf16.msra.mxu0 0
        %1336 = vmatprep.subr.bf16.mxu0 0
        %1337 = vmatpush1.bf16.msra.mxu0 0
        %1338 = vmatprep.subr.bf16.mxu0 0
        %1339 = vmatpush1.bf16.msra.mxu0 0
        %1340 = vmatprep.subr.bf16.mxu0 0
        %1341 = vmatpush1.bf16.msra.mxu0 0
        %1342 = vmatprep.subr.bf16.mxu0 0
        %1343 = vmatpush1.bf16.msra.mxu0 0
        %1344 = vmatprep.subr.bf16.mxu0 0
        %1345 = vmatpush1.bf16.msra.mxu0 0
        %1346 = vmatprep.subr.bf16.mxu0 0
        %1347 = vmatpush1.bf16.msra.mxu0 0
        %1348 = vmatprep.subr.bf16.mxu0 0
        %1349 = vmatpush1.bf16.msra.mxu0 0
        %1350 = vmatprep.subr.bf16.mxu0 0
        %1351 = vmatpush1.bf16.msra.mxu0 0
        %1352 = vmatprep.subr.bf16.mxu0 0
        %1353 = vmatpush1.bf16.msra.mxu0 0
        %1354 = vmatprep.subr.bf16.mxu0 0
        %1355 = vmatpush1.bf16.msra.mxu0 0
        %1356 = vmatprep.subr.bf16.mxu0 0
        %1357 = vmatpush1.bf16.msra.mxu0 0
        %1358 = vmatprep.subr.bf16.mxu0 0
        %1359 = vmatpush1.bf16.msra.mxu0 0
        %1360 = vmatprep.mubr.bf16.mxu0 0
        %1361 = vmatmul.mubr.bf16.gmra.mrb[0].mxu0 %v622
        %v1362 = vpop.f32.mrb[0].mxu0
        %v1363 = vadd.f32 %v1314, %v1362
        %v1364 = vpop.f32.mrb[0].mxu0
        %v1365 = vpop.f32.mrb[0].mxu0
        %v1366 = vpop.f32.mrb[0].mxu0
        %1367 = vdwg.mxu0
        %v1368 = vmul.f32 %v1363, 0.35355338
        %s1369 = scalar_lea.vmem %s4, 32
        %v1370 = vld [vmem:[%s1369] sm:$0xf]
        %v1371 = vld [vmem:[%s1369 + $0x4] sm:$0xf]
        %v1372 = vld [vmem:[%s1369 + $0x8] sm:$0xf]
        %v1373 = vld [vmem:[%s1369 + $0xc] sm:$0xf]
        %s1374 = scalar_lea.vmem %s5, 2
        %v1375 = vld [vmem:[%s1374] sm:$0x1]
        %v1377 = vlaneseq
        %v1378 = vshrl.u32 %v1377, 7
        %v1379 = vsub.s32 0, %v1378
        %v1380 = vrot.slane %v1375, %v1379
        %v1386 = vunpack.c.l.b16 %v1370
        %v1387 = vunpack.c.l.b16 %v1371
        %v1388 = vunpack.c.l.b16 %v1372
        %v1389 = vunpack.c.l.b16 %v1373
        %v1390 = vpack.c.b16 %v1387, %v1386
        %v1391 = vpack.c.b16 %v1389, %v1388
        %1394 = vmatprep.subr.bf16.mxu0 0
        %1395 = vmatpush1.bf16.msra.mxu0 %v1390
        %1396 = vmatprep.subr.bf16.mxu0 0
        %1397 = vmatpush1.bf16.msra.mxu0 %v1391
        %1398 = vmatprep.subr.bf16.mxu0 0
        %1399 = vmatpush1.bf16.msra.mxu0 0
        %1400 = vmatprep.subr.bf16.mxu0 0
        %1401 = vmatpush1.bf16.msra.mxu0 0
        %1402 = vmatprep.subr.bf16.mxu0 0
        %1403 = vmatpush1.bf16.msra.mxu0 0
        %1404 = vmatprep.subr.bf16.mxu0 0
        %1405 = vmatpush1.bf16.msra.mxu0 0
        %1406 = vmatprep.subr.bf16.mxu0 0
        %1407 = vmatpush1.bf16.msra.mxu0 0
        %1408 = vmatprep.subr.bf16.mxu0 0
        %1409 = vmatpush1.bf16.msra.mxu0 0
        %1410 = vmatprep.subr.bf16.mxu0 0
        %1411 = vmatpush1.bf16.msra.mxu0 0
        %1412 = vmatprep.subr.bf16.mxu0 0
        %1413 = vmatpush1.bf16.msra.mxu0 0
        %1414 = vmatprep.subr.bf16.mxu0 0
        %1415 = vmatpush1.bf16.msra.mxu0 0
        %1416 = vmatprep.subr.bf16.mxu0 0
        %1417 = vmatpush1.bf16.msra.mxu0 0
        %1418 = vmatprep.subr.bf16.mxu0 0
        %1419 = vmatpush1.bf16.msra.mxu0 0
        %1420 = vmatprep.subr.bf16.mxu0 0
        %1421 = vmatpush1.bf16.msra.mxu0 0
        %1422 = vmatprep.subr.bf16.mxu0 0
        %1423 = vmatpush1.bf16.msra.mxu0 0
        %1424 = vmatprep.subr.bf16.mxu0 0
        %1425 = vmatpush1.bf16.msra.mxu0 0
        %1426 = vmatprep.mubr.bf16.mxu0 0
        %1427 = vmatmul.mubr.bf16.gmra.mrb[0].mxu0 %v689
        %v1428 = vpop.f32.mrb[0].mxu0
        %v1429 = vadd.f32 %v1380, %v1428
        %v1430 = vpop.f32.mrb[0].mxu0
        %v1431 = vpop.f32.mrb[0].mxu0
        %v1432 = vpop.f32.mrb[0].mxu0
        %1433 = vdwg.mxu0
        %s1434 = scalar_lea.vmem %s6, 32
        %v1435 = vld [vmem:[%s1434] sm:$0xf]
        %v1436 = vld [vmem:[%s1434 + $0x4] sm:$0xf]
        %v1437 = vld [vmem:[%s1434 + $0x8] sm:$0xf]
        %v1438 = vld [vmem:[%s1434 + $0xc] sm:$0xf]
        %s1439 = scalar_lea.vmem %s7, 2
        %v1440 = vld [vmem:[%s1439] sm:$0x1]
        %v1442 = vlaneseq
        %v1443 = vshrl.u32 %v1442, 7
        %v1444 = vsub.s32 0, %v1443
        %v1445 = vrot.slane %v1440, %v1444
        %v1451 = vunpack.c.l.b16 %v1435
        %v1452 = vunpack.c.l.b16 %v1436
        %v1453 = vunpack.c.l.b16 %v1437
        %v1454 = vunpack.c.l.b16 %v1438
        %v1455 = vpack.c.b16 %v1452, %v1451
        %v1456 = vpack.c.b16 %v1454, %v1453
        %1459 = vmatprep.subr.bf16.mxu0 0
        %1460 = vmatpush1.bf16.msra.mxu0 %v1455
        %1461 = vmatprep.subr.bf16.mxu0 0
        %1462 = vmatpush1.bf16.msra.mxu0 %v1456
        %1463 = vmatprep.subr.bf16.mxu0 0
        %1464 = vmatpush1.bf16.msra.mxu0 0
        %1465 = vmatprep.subr.bf16.mxu0 0
        %1466 = vmatpush1.bf16.msra.mxu0 0
        %1467 = vmatprep.subr.bf16.mxu0 0
        %1468 = vmatpush1.bf16.msra.mxu0 0
        %1469 = vmatprep.subr.bf16.mxu0 0
        %1470 = vmatpush1.bf16.msra.mxu0 0
        %1471 = vmatprep.subr.bf16.mxu0 0
        %1472 = vmatpush1.bf16.msra.mxu0 0
        %1473 = vmatprep.subr.bf16.mxu0 0
        %1474 = vmatpush1.bf16.msra.mxu0 0
        %1475 = vmatprep.subr.bf16.mxu0 0
        %1476 = vmatpush1.bf16.msra.mxu0 0
        %1477 = vmatprep.subr.bf16.mxu0 0
        %1478 = vmatpush1.bf16.msra.mxu0 0
        %1479 = vmatprep.subr.bf16.mxu0 0
        %1480 = vmatpush1.bf16.msra.mxu0 0
        %1481 = vmatprep.subr.bf16.mxu0 0
        %1482 = vmatpush1.bf16.msra.mxu0 0
        %1483 = vmatprep.subr.bf16.mxu0 0
        %1484 = vmatpush1.bf16.msra.mxu0 0
        %1485 = vmatprep.subr.bf16.mxu0 0
        %1486 = vmatpush1.bf16.msra.mxu0 0
        %1487 = vmatprep.subr.bf16.mxu0 0
        %1488 = vmatpush1.bf16.msra.mxu0 0
        %1489 = vmatprep.subr.bf16.mxu0 0
        %1490 = vmatpush1.bf16.msra.mxu0 0
        %1491 = vmatprep.mubr.bf16.mxu0 0
        %1492 = vmatmul.mubr.bf16.gmra.mrb[0].mxu0 %v689
        %v1493 = vpop.f32.mrb[0].mxu0
        %v1494 = vadd.f32 %v1445, %v1493
        %v1495 = vpop.f32.mrb[0].mxu0
        %v1496 = vpop.f32.mrb[0].mxu0
        %v1497 = vpop.f32.mrb[0].mxu0
        %1498 = vdwg.mxu0
        %v1499 = vpack.c.bf16 %v1368, %v1368
        %v1500 = vpack.c.bf16 %v1429, %v1429
        %v1502 = vsel %vm796, %v1499, 0
        %v1505 = vsel %vm796, %v1500, 0
        %1507 = vmatprep.subr.bf16.mxu0 0
        %1508 = vmatpush1.bf16.xpose.msra.mxu0 %v1505
        %1509 = vmatprep.subr.bf16.mxu0 0
        %1510 = vmatpush1.bf16.xpose.msra.mxu0 0
        %1511 = vmatprep.subr.bf16.mxu0 0
        %1512 = vmatpush1.bf16.xpose.msra.mxu0 0
        %1513 = vmatprep.subr.bf16.mxu0 0
        %1514 = vmatpush1.bf16.xpose.msra.mxu0 0
        %1515 = vmatprep.subr.bf16.mxu0 0
        %1516 = vmatpush1.bf16.xpose.msra.mxu0 0
        %1517 = vmatprep.subr.bf16.mxu0 0
        %1518 = vmatpush1.bf16.xpose.msra.mxu0 0
        %1519 = vmatprep.subr.bf16.mxu0 0
        %1520 = vmatpush1.bf16.xpose.msra.mxu0 0
        %1521 = vmatprep.subr.bf16.mxu0 0
        %1522 = vmatpush1.bf16.xpose.msra.mxu0 0
        %1523 = vmatprep.subr.bf16.mxu0 0
        %1524 = vmatpush1.bf16.xpose.msra.mxu0 0
        %1525 = vmatprep.subr.bf16.mxu0 0
        %1526 = vmatpush1.bf16.xpose.msra.mxu0 0
        %1527 = vmatprep.subr.bf16.mxu0 0
        %1528 = vmatpush1.bf16.xpose.msra.mxu0 0
        %1529 = vmatprep.subr.bf16.mxu0 0
        %1530 = vmatpush1.bf16.xpose.msra.mxu0 0
        %1531 = vmatprep.subr.bf16.mxu0 0
        %1532 = vmatpush1.bf16.xpose.msra.mxu0 0
        %1533 = vmatprep.subr.bf16.mxu0 0
        %1534 = vmatpush1.bf16.xpose.msra.mxu0 0
        %1535 = vmatprep.subr.bf16.mxu0 0
        %1536 = vmatpush1.bf16.xpose.msra.mxu0 0
        %1537 = vmatprep.subr.bf16.mxu0 0
        %1538 = vmatpush1.bf16.xpose.msra.mxu0 0
        %1539 = vmatprep.mubr.bf16.mxu0 0
        %1540 = vmatmul.mubr.bf16.gmra.mrb[0].mxu0 %v1502
        %v1541 = vpop.f32.mrb[0].mxu0
        %v1542 = vadd.f32 0.0, %v1541
        %v1543 = vpop.f32.mrb[0].mxu0
        %v1544 = vpop.f32.mrb[0].mxu0
        %v1545 = vpop.f32.mrb[0].mxu0
        %1546 = vdwg.mxu0
        %v1547 = vsel %vm796, %v1542, -inf
        %1548 = vmax.xlane.f32.xlu0 %v1547
        %v1549 = vpop.xlane.xlu0 %1548
        %v1550 = vsub.f32 %v1542, %v1549
        %v1551 = vmul.f32 %v1550, 1.442695
        %v1552 = vpow.pop %v1551
        %v1553 = vsel %vm796, %v1552, 0.0
        %1554 = vadd.xlane.f32.xlu0 %v1553
        %v1555 = vpop.xlane.xlu0 %1554
        %v1556 = vrcp.pop %v1555
        %v1557 = vmul.f32 %v1552, %v1556
        %v1558 = vpack.c.bf16 %v1557, %v1557
        %v1559 = vpack.c.bf16 %v1494, %v1494
        %v1561 = vsel %vm796, %v1558, 0
        %v1564 = vsel %vm859, %v1559, 0
        %1566 = vmatprep.subr.bf16.mxu0 0
        %1567 = vmatpush1.bf16.msra.mxu0 %v1564
        %1568 = vmatprep.subr.bf16.mxu0 0
        %1569 = vmatpush1.bf16.msra.mxu0 0
        %1570 = vmatprep.subr.bf16.mxu0 0
        %1571 = vmatpush1.bf16.msra.mxu0 0
        %1572 = vmatprep.subr.bf16.mxu0 0
        %1573 = vmatpush1.bf16.msra.mxu0 0
        %1574 = vmatprep.subr.bf16.mxu0 0
        %1575 = vmatpush1.bf16.msra.mxu0 0
        %1576 = vmatprep.subr.bf16.mxu0 0
        %1577 = vmatpush1.bf16.msra.mxu0 0
        %1578 = vmatprep.subr.bf16.mxu0 0
        %1579 = vmatpush1.bf16.msra.mxu0 0
        %1580 = vmatprep.subr.bf16.mxu0 0
        %1581 = vmatpush1.bf16.msra.mxu0 0
        %1582 = vmatprep.subr.bf16.mxu0 0
        %1583 = vmatpush1.bf16.msra.mxu0 0
        %1584 = vmatprep.subr.bf16.mxu0 0
        %1585 = vmatpush1.bf16.msra.mxu0 0
        %1586 = vmatprep.subr.bf16.mxu0 0
        %1587 = vmatpush1.bf16.msra.mxu0 0
        %1588 = vmatprep.subr.bf16.mxu0 0
        %1589 = vmatpush1.bf16.msra.mxu0 0
        %1590 = vmatprep.subr.bf16.mxu0 0
        %1591 = vmatpush1.bf16.msra.mxu0 0
        %1592 = vmatprep.subr.bf16.mxu0 0
        %1593 = vmatpush1.bf16.msra.mxu0 0
        %1594 = vmatprep.subr.bf16.mxu0 0
        %1595 = vmatpush1.bf16.msra.mxu0 0
        %1596 = vmatprep.subr.bf16.mxu0 0
        %1597 = vmatpush1.bf16.msra.mxu0 0
        %1598 = vmatprep.mubr.bf16.mxu0 0
        %1599 = vmatmul.mubr.bf16.gmra.mrb[0].mxu0 %v1561
        %v1600 = vpop.f32.mrb[0].mxu0
        %v1601 = vadd.f32 0.0, %v1600
        %v1602 = vpop.f32.mrb[0].mxu0
        %v1603 = vpop.f32.mrb[0].mxu0
        %v1604 = vpop.f32.mrb[0].mxu0
        %1605 = vdwg.mxu0
        %v1606 = vpack.c.bf16 %v1601, %v1601
        %s1607 = scalar_lea.vmem %s8, 8
        %v1608 = vld [vmem:[%s1607] sm:$0xf]
        %v1610 = vsel %vm796, %v1606, 0
        %v1613 = vsel %vm859, %v1608, 0
        %1615 = vmatprep.subr.bf16.mxu0 0
        %1616 = vmatpush1.bf16.msra.mxu0 %v1613
        %1617 = vmatprep.subr.bf16.mxu0 0
        %1618 = vmatpush1.bf16.msra.mxu0 0
        %1619 = vmatprep.subr.bf16.mxu0 0
        %1620 = vmatpush1.bf16.msra.mxu0 0
        %1621 = vmatprep.subr.bf16.mxu0 0
        %1622 = vmatpush1.bf16.msra.mxu0 0
        %1623 = vmatprep.subr.bf16.mxu0 0
        %1624 = vmatpush1.bf16.msra.mxu0 0
        %1625 = vmatprep.subr.bf16.mxu0 0
        %1626 = vmatpush1.bf16.msra.mxu0 0
        %1627 = vmatprep.subr.bf16.mxu0 0
        %1628 = vmatpush1.bf16.msra.mxu0 0
        %1629 = vmatprep.subr.bf16.mxu0 0
        %1630 = vmatpush1.bf16.msra.mxu0 0
        %1631 = vmatprep.subr.bf16.mxu0 0
        %1632 = vmatpush1.bf16.msra.mxu0 0
        %1633 = vmatprep.subr.bf16.mxu0 0
        %1634 = vmatpush1.bf16.msra.mxu0 0
        %1635 = vmatprep.subr.bf16.mxu0 0
        %1636 = vmatpush1.bf16.msra.mxu0 0
        %1637 = vmatprep.subr.bf16.mxu0 0
        %1638 = vmatpush1.bf16.msra.mxu0 0
        %1639 = vmatprep.subr.bf16.mxu0 0
        %1640 = vmatpush1.bf16.msra.mxu0 0
        %1641 = vmatprep.subr.bf16.mxu0 0
        %1642 = vmatpush1.bf16.msra.mxu0 0
        %1643 = vmatprep.subr.bf16.mxu0 0
        %1644 = vmatpush1.bf16.msra.mxu0 0
        %1645 = vmatprep.subr.bf16.mxu0 0
        %1646 = vmatpush1.bf16.msra.mxu0 0
        %1647 = vmatprep.mubr.bf16.mxu0 0
        %1648 = vmatmul.mubr.bf16.gmra.mrb[0].mxu0 %v1610
        %v1649 = vpop.f32.mrb[0].mxu0
        %v1650 = vadd.f32 0.0, %v1649
        %v1651 = vpop.f32.mrb[0].mxu0
        %v1652 = vpop.f32.mrb[0].mxu0
        %v1653 = vpop.f32.mrb[0].mxu0
        %1654 = vdwg.mxu0
        %v1655 = vadd.f32 %v1298, %v1650
        %s1656 = scalar_lea.vmem %s2, 48
        %v1657 = vld [vmem:[%s1656] sm:$0xf]
        %v1658 = vld [vmem:[%s1656 + $0x4] sm:$0xf]
        %v1659 = vld [vmem:[%s1656 + $0x8] sm:$0xf]
        %v1660 = vld [vmem:[%s1656 + $0xc] sm:$0xf]
        %s1661 = scalar_lea.vmem %s3, 3
        %v1662 = vld [vmem:[%s1661] sm:$0x1]
        %v1664 = vlaneseq
        %v1665 = vshrl.u32 %v1664, 7
        %v1666 = vsub.s32 0, %v1665
        %v1667 = vrot.slane %v1662, %v1666
        %v1673 = vunpack.c.l.b16 %v1657
        %v1674 = vunpack.c.l.b16 %v1658
        %v1675 = vunpack.c.l.b16 %v1659
        %v1676 = vunpack.c.l.b16 %v1660
        %v1677 = vpack.c.b16 %v1674, %v1673
        %v1678 = vpack.c.b16 %v1676, %v1675
        %1681 = vmatprep.subr.bf16.mxu0 0
        %1682 = vmatpush1.bf16.msra.mxu0 %v1677
        %1683 = vmatprep.subr.bf16.mxu0 0
        %1684 = vmatpush1.bf16.msra.mxu0 %v1678
        %1685 = vmatprep.subr.bf16.mxu0 0
        %1686 = vmatpush1.bf16.msra.mxu0 0
        %1687 = vmatprep.subr.bf16.mxu0 0
        %1688 = vmatpush1.bf16.msra.mxu0 0
        %1689 = vmatprep.subr.bf16.mxu0 0
        %1690 = vmatpush1.bf16.msra.mxu0 0
        %1691 = vmatprep.subr.bf16.mxu0 0
        %1692 = vmatpush1.bf16.msra.mxu0 0
        %1693 = vmatprep.subr.bf16.mxu0 0
        %1694 = vmatpush1.bf16.msra.mxu0 0
        %1695 = vmatprep.subr.bf16.mxu0 0
        %1696 = vmatpush1.bf16.msra.mxu0 0
        %1697 = vmatprep.subr.bf16.mxu0 0
        %1698 = vmatpush1.bf16.msra.mxu0 0
        %1699 = vmatprep.subr.bf16.mxu0 0
        %1700 = vmatpush1.bf16.msra.mxu0 0
        %1701 = vmatprep.subr.bf16.mxu0 0
        %1702 = vmatpush1.bf16.msra.mxu0 0
        %1703 = vmatprep.subr.bf16.mxu0 0
        %1704 = vmatpush1.bf16.msra.mxu0 0
        %1705 = vmatprep.subr.bf16.mxu0 0
        %1706 = vmatpush1.bf16.msra.mxu0 0
        %1707 = vmatprep.subr.bf16.mxu0 0
        %1708 = vmatpush1.bf16.msra.mxu0 0
        %1709 = vmatprep.subr.bf16.mxu0 0
        %1710 = vmatpush1.bf16.msra.mxu0 0
        %1711 = vmatprep.subr.bf16.mxu0 0
        %1712 = vmatpush1.bf16.msra.mxu0 0
        %1713 = vmatprep.mubr.bf16.mxu0 0
        %1714 = vmatmul.mubr.bf16.gmra.mrb[0].mxu0 %v622
        %v1715 = vpop.f32.mrb[0].mxu0
        %v1716 = vadd.f32 %v1667, %v1715
        %v1717 = vpop.f32.mrb[0].mxu0
        %v1718 = vpop.f32.mrb[0].mxu0
        %v1719 = vpop.f32.mrb[0].mxu0
        %1720 = vdwg.mxu0
        %v1721 = vmul.f32 %v1716, 0.35355338
        %s1722 = scalar_lea.vmem %s4, 48
        %v1723 = vld [vmem:[%s1722] sm:$0xf]
        %v1724 = vld [vmem:[%s1722 + $0x4] sm:$0xf]
        %v1725 = vld [vmem:[%s1722 + $0x8] sm:$0xf]
        %v1726 = vld [vmem:[%s1722 + $0xc] sm:$0xf]
        %s1727 = scalar_lea.vmem %s5, 3
        %v1728 = vld [vmem:[%s1727] sm:$0x1]
        %v1730 = vlaneseq
        %v1731 = vshrl.u32 %v1730, 7
        %v1732 = vsub.s32 0, %v1731
        %v1733 = vrot.slane %v1728, %v1732
        %v1739 = vunpack.c.l.b16 %v1723
        %v1740 = vunpack.c.l.b16 %v1724
        %v1741 = vunpack.c.l.b16 %v1725
        %v1742 = vunpack.c.l.b16 %v1726
        %v1743 = vpack.c.b16 %v1740, %v1739
        %v1744 = vpack.c.b16 %v1742, %v1741
        %1747 = vmatprep.subr.bf16.mxu0 0
        %1748 = vmatpush1.bf16.msra.mxu0 %v1743
        %1749 = vmatprep.subr.bf16.mxu0 0
        %1750 = vmatpush1.bf16.msra.mxu0 %v1744
        %1751 = vmatprep.subr.bf16.mxu0 0
        %1752 = vmatpush1.bf16.msra.mxu0 0
        %1753 = vmatprep.subr.bf16.mxu0 0
        %1754 = vmatpush1.bf16.msra.mxu0 0
        %1755 = vmatprep.subr.bf16.mxu0 0
        %1756 = vmatpush1.bf16.msra.mxu0 0
        %1757 = vmatprep.subr.bf16.mxu0 0
        %1758 = vmatpush1.bf16.msra.mxu0 0
        %1759 = vmatprep.subr.bf16.mxu0 0
        %1760 = vmatpush1.bf16.msra.mxu0 0
        %1761 = vmatprep.subr.bf16.mxu0 0
        %1762 = vmatpush1.bf16.msra.mxu0 0
        %1763 = vmatprep.subr.bf16.mxu0 0
        %1764 = vmatpush1.bf16.msra.mxu0 0
        %1765 = vmatprep.subr.bf16.mxu0 0
        %1766 = vmatpush1.bf16.msra.mxu0 0
        %1767 = vmatprep.subr.bf16.mxu0 0
        %1768 = vmatpush1.bf16.msra.mxu0 0
        %1769 = vmatprep.subr.bf16.mxu0 0
        %1770 = vmatpush1.bf16.msra.mxu0 0
        %1771 = vmatprep.subr.bf16.mxu0 0
        %1772 = vmatpush1.bf16.msra.mxu0 0
        %1773 = vmatprep.subr.bf16.mxu0 0
        %1774 = vmatpush1.bf16.msra.mxu0 0
        %1775 = vmatprep.subr.bf16.mxu0 0
        %1776 = vmatpush1.bf16.msra.mxu0 0
        %1777 = vmatprep.subr.bf16.mxu0 0
        %1778 = vmatpush1.bf16.msra.mxu0 0
        %1779 = vmatprep.mubr.bf16.mxu0 0
        %1780 = vmatmul.mubr.bf16.gmra.mrb[0].mxu0 %v689
        %v1781 = vpop.f32.mrb[0].mxu0
        %v1782 = vadd.f32 %v1733, %v1781
        %v1783 = vpop.f32.mrb[0].mxu0
        %v1784 = vpop.f32.mrb[0].mxu0
        %v1785 = vpop.f32.mrb[0].mxu0
        %1786 = vdwg.mxu0
        %s1787 = scalar_lea.vmem %s6, 48
        %v1788 = vld [vmem:[%s1787] sm:$0xf]
        %v1789 = vld [vmem:[%s1787 + $0x4] sm:$0xf]
        %v1790 = vld [vmem:[%s1787 + $0x8] sm:$0xf]
        %v1791 = vld [vmem:[%s1787 + $0xc] sm:$0xf]
        %s1792 = scalar_lea.vmem %s7, 3
        %v1793 = vld [vmem:[%s1792] sm:$0x1]
        %v1795 = vlaneseq
        %v1796 = vshrl.u32 %v1795, 7
        %v1797 = vsub.s32 0, %v1796
        %v1798 = vrot.slane %v1793, %v1797
        %v1804 = vunpack.c.l.b16 %v1788
        %v1805 = vunpack.c.l.b16 %v1789
        %v1806 = vunpack.c.l.b16 %v1790
        %v1807 = vunpack.c.l.b16 %v1791
        %v1808 = vpack.c.b16 %v1805, %v1804
        %v1809 = vpack.c.b16 %v1807, %v1806
        %1812 = vmatprep.subr.bf16.mxu0 0
        %1813 = vmatpush1.bf16.msra.mxu0 %v1808
        %1814 = vmatprep.subr.bf16.mxu0 0
        %1815 = vmatpush1.bf16.msra.mxu0 %v1809
        %1816 = vmatprep.subr.bf16.mxu0 0
        %1817 = vmatpush1.bf16.msra.mxu0 0
        %1818 = vmatprep.subr.bf16.mxu0 0
        %1819 = vmatpush1.bf16.msra.mxu0 0
        %1820 = vmatprep.subr.bf16.mxu0 0
        %1821 = vmatpush1.bf16.msra.mxu0 0
        %1822 = vmatprep.subr.bf16.mxu0 0
        %1823 = vmatpush1.bf16.msra.mxu0 0
        %1824 = vmatprep.subr.bf16.mxu0 0
        %1825 = vmatpush1.bf16.msra.mxu0 0
        %1826 = vmatprep.subr.bf16.mxu0 0
        %1827 = vmatpush1.bf16.msra.mxu0 0
        %1828 = vmatprep.subr.bf16.mxu0 0
        %1829 = vmatpush1.bf16.msra.mxu0 0
        %1830 = vmatprep.subr.bf16.mxu0 0
        %1831 = vmatpush1.bf16.msra.mxu0 0
        %1832 = vmatprep.subr.bf16.mxu0 0
        %1833 = vmatpush1.bf16.msra.mxu0 0
        %1834 = vmatprep.subr.bf16.mxu0 0
        %1835 = vmatpush1.bf16.msra.mxu0 0
        %1836 = vmatprep.subr.bf16.mxu0 0
        %1837 = vmatpush1.bf16.msra.mxu0 0
        %1838 = vmatprep.subr.bf16.mxu0 0
        %1839 = vmatpush1.bf16.msra.mxu0 0
        %1840 = vmatprep.subr.bf16.mxu0 0
        %1841 = vmatpush1.bf16.msra.mxu0 0
        %1842 = vmatprep.subr.bf16.mxu0 0
        %1843 = vmatpush1.bf16.msra.mxu0 0
        %1844 = vmatprep.mubr.bf16.mxu0 0
        %1845 = vmatmul.mubr.bf16.gmra.mrb[0].mxu0 %v689
        %v1846 = vpop.f32.mrb[0].mxu0
        %v1847 = vadd.f32 %v1798, %v1846
        %v1848 = vpop.f32.mrb[0].mxu0
        %v1849 = vpop.f32.mrb[0].mxu0
        %v1850 = vpop.f32.mrb[0].mxu0
        %1851 = vdwg.mxu0
        %v1852 = vpack.c.bf16 %v1721, %v1721
        %v1853 = vpack.c.bf16 %v1782, %v1782
        %v1855 = vsel %vm796, %v1852, 0
        %v1858 = vsel %vm796, %v1853, 0
        %1860 = vmatprep.subr.bf16.mxu0 0
        %1861 = vmatpush1.bf16.xpose.msra.mxu0 %v1858
        %1862 = vmatprep.subr.bf16.mxu0 0
        %1863 = vmatpush1.bf16.xpose.msra.mxu0 0
        %1864 = vmatprep.subr.bf16.mxu0 0
        %1865 = vmatpush1.bf16.xpose.msra.mxu0 0
        %1866 = vmatprep.subr.bf16.mxu0 0
        %1867 = vmatpush1.bf16.xpose.msra.mxu0 0
        %1868 = vmatprep.subr.bf16.mxu0 0
        %1869 = vmatpush1.bf16.xpose.msra.mxu0 0
        %1870 = vmatprep.subr.bf16.mxu0 0
        %1871 = vmatpush1.bf16.xpose.msra.mxu0 0
        %1872 = vmatprep.subr.bf16.mxu0 0
        %1873 = vmatpush1.bf16.xpose.msra.mxu0 0
        %1874 = vmatprep.subr.bf16.mxu0 0
        %1875 = vmatpush1.bf16.xpose.msra.mxu0 0
        %1876 = vmatprep.subr.bf16.mxu0 0
        %1877 = vmatpush1.bf16.xpose.msra.mxu0 0
        %1878 = vmatprep.subr.bf16.mxu0 0
        %1879 = vmatpush1.bf16.xpose.msra.mxu0 0
        %1880 = vmatprep.subr.bf16.mxu0 0
        %1881 = vmatpush1.bf16.xpose.msra.mxu0 0
        %1882 = vmatprep.subr.bf16.mxu0 0
        %1883 = vmatpush1.bf16.xpose.msra.mxu0 0
        %1884 = vmatprep.subr.bf16.mxu0 0
        %1885 = vmatpush1.bf16.xpose.msra.mxu0 0
        %1886 = vmatprep.subr.bf16.mxu0 0
        %1887 = vmatpush1.bf16.xpose.msra.mxu0 0
        %1888 = vmatprep.subr.bf16.mxu0 0
        %1889 = vmatpush1.bf16.xpose.msra.mxu0 0
        %1890 = vmatprep.subr.bf16.mxu0 0
        %1891 = vmatpush1.bf16.xpose.msra.mxu0 0
        %1892 = vmatprep.mubr.bf16.mxu0 0
        %1893 = vmatmul.mubr.bf16.gmra.mrb[0].mxu0 %v1855
        %v1894 = vpop.f32.mrb[0].mxu0
        %v1895 = vadd.f32 0.0, %v1894
        %v1896 = vpop.f32.mrb[0].mxu0
        %v1897 = vpop.f32.mrb[0].mxu0
        %v1898 = vpop.f32.mrb[0].mxu0
        %1899 = vdwg.mxu0
        %v1900 = vsel %vm796, %v1895, -inf
        %1901 = vmax.xlane.f32.xlu0 %v1900
        %v1902 = vpop.xlane.xlu0 %1901
        %v1903 = vsub.f32 %v1895, %v1902
        %v1904 = vmul.f32 %v1903, 1.442695
        %v1905 = vpow.pop %v1904
        %v1906 = vsel %vm796, %v1905, 0.0
        %1907 = vadd.xlane.f32.xlu0 %v1906
        %v1908 = vpop.xlane.xlu0 %1907
        %v1909 = vrcp.pop %v1908
        %v1910 = vmul.f32 %v1905, %v1909
        %v1911 = vpack.c.bf16 %v1910, %v1910
        %v1912 = vpack.c.bf16 %v1847, %v1847
        %v1914 = vsel %vm796, %v1911, 0
        %v1917 = vsel %vm859, %v1912, 0
        %1919 = vmatprep.subr.bf16.mxu0 0
        %1920 = vmatpush1.bf16.msra.mxu0 %v1917
        %1921 = vmatprep.subr.bf16.mxu0 0
        %1922 = vmatpush1.bf16.msra.mxu0 0
        %1923 = vmatprep.subr.bf16.mxu0 0
        %1924 = vmatpush1.bf16.msra.mxu0 0
        %1925 = vmatprep.subr.bf16.mxu0 0
        %1926 = vmatpush1.bf16.msra.mxu0 0
        %1927 = vmatprep.subr.bf16.mxu0 0
        %1928 = vmatpush1.bf16.msra.mxu0 0
        %1929 = vmatprep.subr.bf16.mxu0 0
        %1930 = vmatpush1.bf16.msra.mxu0 0
        %1931 = vmatprep.subr.bf16.mxu0 0
        %1932 = vmatpush1.bf16.msra.mxu0 0
        %1933 = vmatprep.subr.bf16.mxu0 0
        %1934 = vmatpush1.bf16.msra.mxu0 0
        %1935 = vmatprep.subr.bf16.mxu0 0
        %1936 = vmatpush1.bf16.msra.mxu0 0
        %1937 = vmatprep.subr.bf16.mxu0 0
        %1938 = vmatpush1.bf16.msra.mxu0 0
        %1939 = vmatprep.subr.bf16.mxu0 0
        %1940 = vmatpush1.bf16.msra.mxu0 0
        %1941 = vmatprep.subr.bf16.mxu0 0
        %1942 = vmatpush1.bf16.msra.mxu0 0
        %1943 = vmatprep.subr.bf16.mxu0 0
        %1944 = vmatpush1.bf16.msra.mxu0 0
        %1945 = vmatprep.subr.bf16.mxu0 0
        %1946 = vmatpush1.bf16.msra.mxu0 0
        %1947 = vmatprep.subr.bf16.mxu0 0
        %1948 = vmatpush1.bf16.msra.mxu0 0
        %1949 = vmatprep.subr.bf16.mxu0 0
        %1950 = vmatpush1.bf16.msra.mxu0 0
        %1951 = vmatprep.mubr.bf16.mxu0 0
        %1952 = vmatmul.mubr.bf16.gmra.mrb[0].mxu0 %v1914
        %v1953 = vpop.f32.mrb[0].mxu0
        %v1954 = vadd.f32 0.0, %v1953
        %v1955 = vpop.f32.mrb[0].mxu0
        %v1956 = vpop.f32.mrb[0].mxu0
        %v1957 = vpop.f32.mrb[0].mxu0
        %1958 = vdwg.mxu0
        %v1959 = vpack.c.bf16 %v1954, %v1954
        %s1960 = scalar_lea.vmem %s8, 12
        %v1961 = vld [vmem:[%s1960] sm:$0xf]
        %v1963 = vsel %vm796, %v1959, 0
        %v1966 = vsel %vm859, %v1961, 0
        %1968 = vmatprep.subr.bf16.mxu0 0
        %1969 = vmatpush1.bf16.msra.mxu0 %v1966
        %1970 = vmatprep.subr.bf16.mxu0 0
        %1971 = vmatpush1.bf16.msra.mxu0 0
        %1972 = vmatprep.subr.bf16.mxu0 0
        %1973 = vmatpush1.bf16.msra.mxu0 0
        %1974 = vmatprep.subr.bf16.mxu0 0
        %1975 = vmatpush1.bf16.msra.mxu0 0
        %1976 = vmatprep.subr.bf16.mxu0 0
        %1977 = vmatpush1.bf16.msra.mxu0 0
        %1978 = vmatprep.subr.bf16.mxu0 0
        %1979 = vmatpush1.bf16.msra.mxu0 0
        %1980 = vmatprep.subr.bf16.mxu0 0
        %1981 = vmatpush1.bf16.msra.mxu0 0
        %1982 = vmatprep.subr.bf16.mxu0 0
        %1983 = vmatpush1.bf16.msra.mxu0 0
        %1984 = vmatprep.subr.bf16.mxu0 0
        %1985 = vmatpush1.bf16.msra.mxu0 0
        %1986 = vmatprep.subr.bf16.mxu0 0
        %1987 = vmatpush1.bf16.msra.mxu0 0
        %1988 = vmatprep.subr.bf16.mxu0 0
        %1989 = vmatpush1.bf16.msra.mxu0 0
        %1990 = vmatprep.subr.bf16.mxu0 0
        %1991 = vmatpush1.bf16.msra.mxu0 0
        %1992 = vmatprep.subr.bf16.mxu0 0
        %1993 = vmatpush1.bf16.msra.mxu0 0
        %1994 = vmatprep.subr.bf16.mxu0 0
        %1995 = vmatpush1.bf16.msra.mxu0 0
        %1996 = vmatprep.subr.bf16.mxu0 0
        %1997 = vmatpush1.bf16.msra.mxu0 0
        %1998 = vmatprep.subr.bf16.mxu0 0
        %1999 = vmatpush1.bf16.msra.mxu0 0
        %2000 = vmatprep.mubr.bf16.mxu0 0
        %2001 = vmatmul.mubr.bf16.gmra.mrb[0].mxu0 %v1963
        %v2002 = vpop.f32.mrb[0].mxu0
        %v2003 = vadd.f32 0.0, %v2002
        %v2004 = vpop.f32.mrb[0].mxu0
        %v2005 = vpop.f32.mrb[0].mxu0
        %v2006 = vpop.f32.mrb[0].mxu0
        %2007 = vdwg.mxu0
        %v2008 = vadd.f32 %v1655, %v2003
        %v2009 = vld [vmem:[%s9] sm:$0x1]
        %v2011 = vlaneseq
        %v2012 = vshrl.u32 %v2011, 7
        %v2013 = vsub.s32 0, %v2012
        %v2014 = vrot.slane %v2009, %v2013
        %v2016 = vadd.f32 %v2008, %v2014
        %v2017 = vadd.f32 %v594, %v2016
        %v2018 = vld [vmem:[%s14] sm:$0x1]
        %v2019 = vld [vmem:[%s15] sm:$0x1]
        %v2020 = vsel %vm620, %v2017, 0.0
        %2021 = vadd.xlane.f32.xlu0 %v2020
        %v2022 = vpop.xlane.xlu0 %2021
        %v2023 = vrcp.pop 32.0
        %v2024 = vmul.f32 %v2022, %v2023
        %v2025 = vsub.f32 %v2017, %v2024
        %v2026 = vmul.f32 %v2025, %v2025
        %v2027 = vsel %vm620, %v2026, 0.0
        %2028 = vadd.xlane.f32.xlu0 %v2027
        %v2029 = vpop.xlane.xlu0 %2028
        %v2030 = vmul.f32 %v2029, %v2023
        %v2031 = vadd.f32 %v2030, 1e-06
        %v2032 = vrsqrt.pop %v2031
        %v2033 = vmul.f32 %v2025, %v2032
        %v2035 = vlaneseq
        %v2036 = vshrl.u32 %v2035, 7
        %v2037 = vsub.s32 0, %v2036
        %v2038 = vrot.slane %v2018, %v2037
        %v2040 = vmul.f32 %v2033, %v2038
        %v2042 = vlaneseq
        %v2043 = vshrl.u32 %v2042, 7
        %v2044 = vsub.s32 0, %v2043
        %v2045 = vrot.slane %v2019, %v2044
        %v2047 = vadd.f32 %v2040, %v2045
        %v2048 = vpack.c.bf16 %v2047, %v2047
        %v2049 = vld [vmem:[%s10] sm:$0xf]
        %v2050 = vld [vmem:[%s10 + $0x4] sm:$0xf]
        %v2051 = vld [vmem:[%s10 + $0x8] sm:$0xf]
        %v2052 = vld [vmem:[%s10 + $0xc] sm:$0xf]
        %v2053 = vld [vmem:[%s11] sm:$0x1]
        %v2055 = vlaneseq
        %v2056 = vshrl.u32 %v2055, 7
        %v2057 = vsub.s32 0, %v2056
        %v2058 = vrot.slane %v2053, %v2057
        %v2064 = vunpack.c.l.b16 %v2049
        %v2065 = vunpack.c.l.b16 %v2050
        %v2066 = vunpack.c.l.b16 %v2051
        %v2067 = vunpack.c.l.b16 %v2052
        %v2068 = vpack.c.b16 %v2065, %v2064
        %v2069 = vpack.c.b16 %v2067, %v2066
        %v2073 = vsel %vm620, %v2048, 0
        %2075 = vmatprep.subr.bf16.mxu0 0
        %2076 = vmatpush1.bf16.msra.mxu0 %v2068
        %2077 = vmatprep.subr.bf16.mxu0 0
        %2078 = vmatpush1.bf16.msra.mxu0 %v2069
        %2079 = vmatprep.subr.bf16.mxu0 0
        %2080 = vmatpush1.bf16.msra.mxu0 0
        %2081 = vmatprep.subr.bf16.mxu0 0
        %2082 = vmatpush1.bf16.msra.mxu0 0
        %2083 = vmatprep.subr.bf16.mxu0 0
        %2084 = vmatpush1.bf16.msra.mxu0 0
        %2085 = vmatprep.subr.bf16.mxu0 0
        %2086 = vmatpush1.bf16.msra.mxu0 0
        %2087 = vmatprep.subr.bf16.mxu0 0
        %2088 = vmatpush1.bf16.msra.mxu0 0
        %2089 = vmatprep.subr.bf16.mxu0 0
        %2090 = vmatpush1.bf16.msra.mxu0 0
        %2091 = vmatprep.subr.bf16.mxu0 0
        %2092 = vmatpush1.bf16.msra.mxu0 0
        %2093 = vmatprep.subr.bf16.mxu0 0
        %2094 = vmatpush1.bf16.msra.mxu0 0
        %2095 = vmatprep.subr.bf16.mxu0 0
        %2096 = vmatpush1.bf16.msra.mxu0 0
        %2097 = vmatprep.subr.bf16.mxu0 0
        %2098 = vmatpush1.bf16.msra.mxu0 0
        %2099 = vmatprep.subr.bf16.mxu0 0
        %2100 = vmatpush1.bf16.msra.mxu0 0
        %2101 = vmatprep.subr.bf16.mxu0 0
        %2102 = vmatpush1.bf16.msra.mxu0 0
        %2103 = vmatprep.subr.bf16.mxu0 0
        %2104 = vmatpush1.bf16.msra.mxu0 0
        %2105 = vmatprep.subr.bf16.mxu0 0
        %2106 = vmatpush1.bf16.msra.mxu0 0
        %2107 = vmatprep.mubr.bf16.mxu0 0
        %2108 = vmatmul.mubr.bf16.gmra.mrb[0].mxu0 %v2073
        %v2109 = vpop.f32.mrb[0].mxu0
        %v2110 = vadd.f32 %v2058, %v2109
        %v2111 = vpop.f32.mrb[0].mxu0
        %v2112 = vpop.f32.mrb[0].mxu0
        %v2113 = vpop.f32.mrb[0].mxu0
        %2114 = vdwg.mxu0
        %v2115 = vmax.f32 %v2110, 0.0
        %v2116 = vpack.c.bf16 %v2115, %v2115
        %v2117 = vld [vmem:[%s12] sm:$0xf]
        %v2118 = vld [vmem:[%s12 + $0x4] sm:$0xf]
        %v2119 = vld [vmem:[%s12 + $0x8] sm:$0xf]
        %v2120 = vld [vmem:[%s12 + $0xc] sm:$0xf]
        %v2121 = vld [vmem:[%s12 + $0x10] sm:$0xf]
        %v2122 = vld [vmem:[%s12 + $0x14] sm:$0xf]
        %v2123 = vld [vmem:[%s12 + $0x18] sm:$0xf]
        %v2124 = vld [vmem:[%s12 + $0x1c] sm:$0xf]
        %v2125 = vld [vmem:[%s13] sm:$0x1]
        %v2127 = vlaneseq
        %v2128 = vshrl.u32 %v2127, 7
        %v2129 = vsub.s32 0, %v2128
        %v2130 = vrot.slane %v2125, %v2129
        %v2140 = vunpack.c.l.b16 %v2117
        %v2141 = vunpack.c.l.b16 %v2118
        %v2142 = vunpack.c.l.b16 %v2119
        %v2143 = vunpack.c.l.b16 %v2120
        %v2144 = vunpack.c.l.b16 %v2121
        %v2145 = vunpack.c.l.b16 %v2122
        %v2146 = vunpack.c.l.b16 %v2123
        %v2147 = vunpack.c.l.b16 %v2124
        %v2148 = vpack.c.b16 %v2141, %v2140
        %v2149 = vpack.c.b16 %v2143, %v2142
        %v2150 = vpack.c.b16 %v2145, %v2144
        %v2151 = vpack.c.b16 %v2147, %v2146
        %vm2156 = vcmask 523264
        %v2158 = vsel %vm2156, %v2116, 0
        %2160 = vmatprep.subr.bf16.mxu0 0
        %2161 = vmatpush1.bf16.msra.mxu0 %v2148
        %2162 = vmatprep.subr.bf16.mxu0 0
        %2163 = vmatpush1.bf16.msra.mxu0 %v2149
        %2164 = vmatprep.subr.bf16.mxu0 0
        %2165 = vmatpush1.bf16.msra.mxu0 %v2150
        %2166 = vmatprep.subr.bf16.mxu0 0
        %2167 = vmatpush1.bf16.msra.mxu0 %v2151
        %2168 = vmatprep.subr.bf16.mxu0 0
        %2169 = vmatpush1.bf16.msra.mxu0 0
        %2170 = vmatprep.subr.bf16.mxu0 0
        %2171 = vmatpush1.bf16.msra.mxu0 0
        %2172 = vmatprep.subr.bf16.mxu0 0
        %2173 = vmatpush1.bf16.msra.mxu0 0
        %2174 = vmatprep.subr.bf16.mxu0 0
        %2175 = vmatpush1.bf16.msra.mxu0 0
        %2176 = vmatprep.subr.bf16.mxu0 0
        %2177 = vmatpush1.bf16.msra.mxu0 0
        %2178 = vmatprep.subr.bf16.mxu0 0
        %2179 = vmatpush1.bf16.msra.mxu0 0
        %2180 = vmatprep.subr.bf16.mxu0 0
        %2181 = vmatpush1.bf16.msra.mxu0 0
        %2182 = vmatprep.subr.bf16.mxu0 0
        %2183 = vmatpush1.bf16.msra.mxu0 0
        %2184 = vmatprep.subr.bf16.mxu0 0
        %2185 = vmatpush1.bf16.msra.mxu0 0
        %2186 = vmatprep.subr.bf16.mxu0 0
        %2187 = vmatpush1.bf16.msra.mxu0 0
        %2188 = vmatprep.subr.bf16.mxu0 0
        %2189 = vmatpush1.bf16.msra.mxu0 0
        %2190 = vmatprep.subr.bf16.mxu0 0
        %2191 = vmatpush1.bf16.msra.mxu0 0
        %2192 = vmatprep.mubr.bf16.mxu0 0
        %2193 = vmatmul.mubr.bf16.gmra.mrb[0].mxu0 %v2158
        %v2194 = vpop.f32.mrb[0].mxu0
        %v2195 = vadd.f32 %v2130, %v2194
        %v2196 = vpop.f32.mrb[0].mxu0
        %v2197 = vpop.f32.mrb[0].mxu0
        %v2198 = vpop.f32.mrb[0].mxu0
        %2199 = vdwg.mxu0
        %v2200 = vadd.f32 %v2047, %v2195
        %v2201 = vld [vmem:[%s16] sm:$0x1]
        %v2202 = vld [vmem:[%s17] sm:$0x1]
        %v2203 = vsel %vm620, %v2200, 0.0
        %2204 = vadd.xlane.f32.xlu0 %v2203
        %v2205 = vpop.xlane.xlu0 %2204
        %v2206 = vmul.f32 %v2205, %v2023
        %v2207 = vsub.f32 %v2200, %v2206
        %v2208 = vmul.f32 %v2207, %v2207
        %v2209 = vsel %vm620, %v2208, 0.0
        %2210 = vadd.xlane.f32.xlu0 %v2209
        %v2211 = vpop.xlane.xlu0 %2210
        %v2212 = vmul.f32 %v2211, %v2023
        %v2213 = vadd.f32 %v2212, 1e-06
        %v2214 = vrsqrt.pop %v2213
        %v2215 = vmul.f32 %v2207, %v2214
        %v2217 = vlaneseq
        %v2218 = vshrl.u32 %v2217, 7
        %v2219 = vsub.s32 0, %v2218
        %v2220 = vrot.slane %v2201, %v2219
        %v2222 = vmul.f32 %v2215, %v2220
        %v2224 = vlaneseq
        %v2225 = vshrl.u32 %v2224, 7
        %v2226 = vsub.s32 0, %v2225
        %v2227 = vrot.slane %v2202, %v2226
        %v2229 = vadd.f32 %v2222, %v2227
        %2230 = vst.msk [vmem:[%s580] sm:$0xff] %vm620, %v2229
        %s2231 = sand.u32 %s437, 1
        %s2232 = scalar_lea.sflag [#allocation3], %s2231
        %s2233 = sand.u32 %s437, 1
        %s2234 = smul.addr %s2233, 8
        %s2235 = scalar_lea.vmem [#allocation2], %s2234
        // Predicated region
        $region93: #{tpu_custom_call.1} parent=91 // pred_check
          %p2236 = pneg %p447
        $region94: #{tpu_custom_call.1} parent=91 // pred_check_branch
          %2238 = sbr.rel (%p2236) target = $region96
        $region95: #{tpu_custom_call.1} parent=91 // pred_region
          %s2240 = ssub.s32 128, 128
          %2241 = vsyncadd %s2232, %s2240
          %s2242 = sadd.s32 %s37, %s36
          %s2243 = smul.addr %s2242, 128
          %s2244 = scalar_lea.hbm %s18, %s2243
          %s2246 = sshll.u32 %s2235, 4
          %s2247 = int_to_ptr.vmem [resolvable:$true] %s2246
          %2249 = dma.vmem_to_hbm [thread:$0]  %s2247, 128, %s2244, %s2232
        $region96: #{tpu_custom_call.1} parent=91 // pred_fallthru
          _
      $region92: #{tpu_custom_call.1} parent=5 // pred_fallthru
        _
      %p2250 = scmp.le.s32.totalorder 2, %s27
      // Predicated region
      $region97: #{tpu_custom_call.1} parent=5 // pred_check
        %p2251 = pneg %p2250
      $region98: #{tpu_custom_call.1} parent=5 // pred_check_branch
        %2253 = sbr.rel (%p2251) target = $region100
      $region99: #{tpu_custom_call.1} parent=5 // pred_region
        %s2254 = ssub.s32 %s27, 2
        // Predicated region
        $region101: #{tpu_custom_call.1} parent=99 // pred_check
          %p2255 = pneg %p453
        $region102: #{tpu_custom_call.1} parent=99 // pred_check_branch
          %2257 = sbr.rel (%p2255) target = $region104
        $region103: #{tpu_custom_call.1} parent=99 // pred_region
          %s2258 = sand.u32 %s438, 1
          %s2259 = scalar_lea.sflag [#allocation3], %s2258
          %s2260 = sand.u32 %s438, 1
          %s2261 = smul.addr %s2260, 8
          %s2262 = scalar_lea.vmem [#allocation2], %s2261
          %2263 = dma.done %s2259, 128
        $region104: #{tpu_custom_call.1} parent=99 // pred_fallthru
          _
      $region100: #{tpu_custom_call.1} parent=5 // pred_fallthru
        _
    $region6: #{tpu_custom_call.1} parent=1 // loop_footer
      %s31 = sadd.s32 1, %s27
    $region7: #{tpu_custom_call.1} parent=1 // loop_footer_branch
      %26 = sbr.rel target = $region3
    $region8: #{tpu_custom_call.1} parent=1 // loop_exit
      _
    %2264 = vsyncpa [#allocation3], 1
    %s2265 = scalar_lea.sflag [#allocation3], 1
    %2266 = vsyncpa %s2265, 1

</llo_original>
